<compile_context>
chip_gen: v7x
topology: tpu7x:2x2x1
jax: 0.10.0
libtpu: 0.0.40
codegen_flags: <defaults>
</compile_context>

<pallas_src>
import math
import jax
import jax.numpy as jnp
from jax import lax
from jax.experimental import pallas as pl
from jax.experimental.pallas import tpu as pltpu  # noqa: F401  (TPU backend assumed)

# ----------------------- model config (small, synthetic) -----------------------
VOCAB = 64
N_EMBD = 32
N_HEAD = 4
BLOCK_SIZE = 8
BATCH = 2
LANES = 128


def _slab_layout(C, V, T):
    """Row offsets of every parameter inside the two packed slabs."""
    return dict(
        # bf16 weight slab (all matmul weights, stored transposed to (in, out)):
        W_QKV=0, W_FC=C, W_PROJ2=2 * C, W_LM=6 * C, W_PROJ=7 * C, W_ROWS=8 * C,
        # f32 slab ([wte; wpe] block + one row per LN/bias parameter):
        P_EMB=0,
        P_LN1G=V + T, P_LN1B=V + T + 1, P_LN2G=V + T + 2, P_LN2B=V + T + 3,
        P_LNFG=V + T + 4, P_LNFB=V + T + 5,
        P_BQKV=V + T + 6, P_BPROJ=V + T + 7, P_BFC=V + T + 8, P_BPROJ2=V + T + 9,
        P_ROWS=-(-(V + T + 10) // 8) * 8,
    )


# ----------------------------- in-kernel helpers --------------------------------
def _layer_norm_f32(x, g, b, eps=1e-5):
    mu = jnp.mean(x, axis=-1, keepdims=True)
    var = jnp.mean(jnp.square(x - mu), axis=-1, keepdims=True)
    return (x - mu) * lax.rsqrt(var + eps) * g + b


def _erf_f32(x):
    # Abramowitz & Stegun 7.1.26; max abs error ~1.5e-7. Only ops with guaranteed
    # Mosaic lowerings (exp / mul / add / abs / where / div).
    a1, a2, a3, a4, a5 = 0.254829592, -0.284496736, 1.421413741, -1.453152027, 1.061405429
    p = 0.3275911
    sgn = jnp.where(x >= 0.0, 1.0, -1.0)
    ax = jnp.abs(x)
    t = 1.0 / (1.0 + p * ax)
    poly = ((((a5 * t + a4) * t + a3) * t + a2) * t + a1) * t
    return sgn * (1.0 - poly * jnp.exp(-ax * ax))


def _gelu_exact(x):
    # exact (erf-based) GELU, matching torch nn.GELU()
    return 0.5 * x * (1.0 + _erf_f32(x * 0.7071067811865476))


def _full_spec(arr):
    shape = tuple(arr.shape)
    return pl.BlockSpec(shape, lambda: (0,) * len(shape))


# ------------------------- fused forward-pass kernel -----------------------------
def _make_fused_forward_kernel(B, T, C, nh, V, with_loss):
    hd = C // nh
    BT = B * T
    VT = V + T
    scale = 1.0 / math.sqrt(hd)
    lay = _slab_layout(C, V, T)
    f32, bf16 = jnp.float32, jnp.bfloat16

    def prow(pslab, r, width):           # one (1, width) f32 parameter row
        return pslab[r:r + 1, 0:width]

    def mm(a, w_bf16):                   # bf16 MXU feed, f32 accumulate
        return jnp.dot(a.astype(bf16), w_bf16, preferred_element_type=f32)

    def kernel(*refs):
        if with_loss:
            idx_ref, wslab, pslab, tgt_ref, logits_ref, loss_ref = refs
        else:
            idx_ref, wslab, pslab, logits_ref = refs

        # ---- token + position embedding: one fused one-hot matmul vs [wte; wpe] ----
        idx_col = idx_ref[...]                                          # (BT, 1) i32
        col = lax.broadcasted_iota(jnp.int32, (BT, VT), 1)
        row = lax.broadcasted_iota(jnp.int32, (BT, VT), 0)
        onehot = col == idx_col                                         # token columns
        for b in range(B):                                              # position columns
            pos = row - b * T
            onehot = jnp.logical_or(onehot,
                                    (pos >= 0) & (pos < T) & (col == V + pos))
        x = jnp.dot(onehot.astype(f32), pslab[0:VT, 0:C],
                    preferred_element_type=f32)                         # (BT, C) f32

        # ---- block-diagonal causal mask as an additive bias (computed once) ----
        r2 = lax.broadcasted_iota(jnp.int32, (BT, BT), 0)
        c2 = lax.broadcasted_iota(jnp.int32, (BT, BT), 1)
        same_batch = jnp.zeros((BT, BT), jnp.bool_)
        for b in range(B):
            lo, hi = b * T, (b + 1) * T
            same_batch = jnp.logical_or(
                same_batch, (r2 >= lo) & (r2 < hi) & (c2 >= lo) & (c2 < hi))
        mask_bias = jnp.where(same_batch & (c2 <= r2), 0.0, -1e30).astype(f32)

        # ---- causal self-attention (all batches & heads in one pass) ----
        h = _layer_norm_f32(x, prow(pslab, lay["P_LN1G"], C),
                            prow(pslab, lay["P_LN1B"], C))
        qkv = mm(h, wslab[lay["W_QKV"]:lay["W_QKV"] + C, 0:3 * C]) \
            + prow(pslab, lay["P_BQKV"], 3 * C)                         # (BT, 3C) f32

        y = x + prow(pslab, lay["P_BPROJ"], C)      # residual + c_proj bias, added once
        for hh in range(nh):                        # head outputs folded into c_proj
            c0 = hh * hd
            qh = qkv[:, c0:c0 + hd].astype(bf16)
            kh = qkv[:, C + c0:C + c0 + hd].astype(bf16)
            vh = qkv[:, 2 * C + c0:2 * C + c0 + hd].astype(bf16)
            s = lax.dot_general(qh, kh, (((1,), (1,)), ((), ())),       # q·kᵀ, no transpose
                                preferred_element_type=f32) * scale + mask_bias
            m = jnp.max(s, axis=-1, keepdims=True)
            e = jnp.exp(s - m)
            pr = e * pl.reciprocal(jnp.sum(e, axis=-1, keepdims=True), approx=True)
            ho = jnp.dot(pr.astype(bf16), vh, preferred_element_type=f32)   # (BT, hd)
            y = y + mm(ho, wslab[lay["W_PROJ"] + c0:lay["W_PROJ"] + c0 + hd, 0:C])

        # ---- MLP ----
        h = _layer_norm_f32(y, prow(pslab, lay["P_LN2G"], C),
                            prow(pslab, lay["P_LN2B"], C))
        ff = mm(h, wslab[lay["W_FC"]:lay["W_FC"] + C, 0:4 * C]) \
            + prow(pslab, lay["P_BFC"], 4 * C)
        ff = _gelu_exact(ff)
        y = y + mm(ff, wslab[lay["W_PROJ2"]:lay["W_PROJ2"] + 4 * C, 0:C]) \
              + prow(pslab, lay["P_BPROJ2"], C)

        # ---- final LN + bias-free lm_head ----
        h = _layer_norm_f32(y, prow(pslab, lay["P_LNFG"], C),
                            prow(pslab, lay["P_LNFB"], C))
        logits = mm(h, wslab[lay["W_LM"]:lay["W_LM"] + C, 0:V])         # (BT, V) f32
        logits_ref[...] = logits

        if with_loss:
            # fused mean cross-entropy over all positions.
            # TODO(synk): ignore_index=-1 semantics of nanoGPT's F.cross_entropy not implemented.
            tgt_col = tgt_ref[...]                                      # (BT, 1) i32
            vcol = lax.broadcasted_iota(jnp.int32, (BT, V), 1)
            picked = jnp.sum(jnp.where(vcol == tgt_col, logits, 0.0),
                             axis=-1, keepdims=True)                    # (BT, 1)
            mx = jnp.max(logits, axis=-1, keepdims=True)
            lse = mx + jnp.log(jnp.sum(jnp.exp(logits - mx), axis=-1, keepdims=True))
            loss_ref[...] = jnp.sum(lse - picked, axis=0, keepdims=True) * (1.0 / BT)

    return kernel


def fused_gpt_forward(idx_col, wslab, pslab, B, T, tgt_col=None):
    BT, V = B * T, VOCAB
    with_loss = tgt_col is not None
    kernel = _make_fused_forward_kernel(B, T, N_EMBD, N_HEAD, V, with_loss)
    args = [idx_col, wslab, pslab] + ([tgt_col] if with_loss else [])
    logits_shape = jax.ShapeDtypeStruct((BT, V), jnp.float32)
    logits_spec = pl.BlockSpec((BT, V), lambda: (0, 0))
    if with_loss:
        out_shape = (logits_shape, jax.ShapeDtypeStruct((1, 1), jnp.float32))
        out_specs = (logits_spec, pl.BlockSpec((1, 1), lambda: (0, 0)))
    else:
        out_shape, out_specs = logits_shape, logits_spec
    return pl.pallas_call(                      # gridless: single invocation on purpose
        kernel,
        out_shape=out_shape,
        in_specs=[_full_spec(a) for a in args],
        out_specs=out_specs,
    )(*args)


# --------------------------- fused spatial-cost kernel ---------------------------
def _spatial_cost_kernel(w_ref, d_ref, o_ref):
    part = jnp.sum(jnp.abs(w_ref[...]) * d_ref[...], axis=1, keepdims=True)
    o_ref[...] = jnp.sum(part, axis=0, keepdims=True)


# ------------------------------ glue / reference --------------------------------
def compute_distance_matrix(N, M, A, B, D):
    # Matches the PyTorch helper; returns (M, N) = (out_features, in_features).
    x_in = jnp.linspace(-A / 2, A / 2, N).reshape(N, 1)
    y_in = jnp.full((N, 1), -D / 2)
    x_out = jnp.linspace(-B / 2, B / 2, M).reshape(1, M)
    y_out = jnp.full((1, M), D / 2)
    dist = jnp.sqrt((x_out - x_in) ** 2 + (y_out - y_in) ** 2)
    return dist.T


def init_params(key):
    C = N_EMBD
    ks = jax.random.split(key, 10)
    n = lambda k, shape: (0.02 * jax.random.normal(k, shape)).astype(jnp.float32)
    return {
        "wte": n(ks[0], (VOCAB, C)),
        "wpe": n(ks[1], (BLOCK_SIZE, C)),
        "ln1_g": jnp.ones((C,), jnp.float32), "ln1_b": jnp.zeros((C,), jnp.float32),
        "ln2_g": jnp.ones((C,), jnp.float32), "ln2_b": jnp.zeros((C,), jnp.float32),
        "lnf_g": jnp.ones((C,), jnp.float32), "lnf_b": jnp.zeros((C,), jnp.float32),
        "attn_c_attn_w": n(ks[2], (3 * C, C)), "attn_c_attn_b": jnp.zeros((3 * C,), jnp.float32),
        "attn_c_proj_w": n(ks[3], (C, C)),     "attn_c_proj_b": jnp.zeros((C,), jnp.float32),
        "mlp_c_fc_w": n(ks[4], (4 * C, C)),    "mlp_c_fc_b": jnp.zeros((4 * C,), jnp.float32),
        "mlp_c_proj_w": n(ks[5], (C, 4 * C)),  "mlp_c_proj_b": jnp.zeros((C,), jnp.float32),
        "lm_head_w": n(ks[6], (VOCAB, C)),     # bias-free, like nanoGPT lm_head
    }


def pack_params(p, A=1.0, B=1.0, D=1.0):
    """One-time layout prep: 2 forward slabs (bf16 weights + f32 emb/LN/bias) and
    2 spatial-cost slabs (flattened |W| / dist pairs)."""
    C, V, T = N_EMBD, VOCAB, BLOCK_SIZE
    lay = _slab_layout(C, V, T)
    assert 4 * C <= LANES and 3 * C <= LANES and V <= LANES

    # --- bf16 MXU-weight slab (weights transposed to (in, out) layout) ---
    w = jnp.zeros((lay["W_ROWS"], LANES), jnp.float32)
    w = w.at[lay["W_QKV"]:lay["W_QKV"] + C, 0:3 * C].set(p["attn_c_attn_w"].T)
    w = w.at[lay["W_FC"]:lay["W_FC"] + C, 0:4 * C].set(p["mlp_c_fc_w"].T)
    w = w.at[lay["W_PROJ2"]:lay["W_PROJ2"] + 4 * C, 0:C].set(p["mlp_c_proj_w"].T)
    w = w.at[lay["W_LM"]:lay["W_LM"] + C, 0:V].set(p["lm_head_w"].T)
    w = w.at[lay["W_PROJ"]:lay["W_PROJ"] + C, 0:C].set(p["attn_c_proj_w"].T)
    wslab = w.astype(jnp.bfloat16)

    # --- f32 slab: [wte; wpe] + LN gains/biases + linear biases (one row each) ---
    ps = jnp.zeros((lay["P_ROWS"], LANES), jnp.float32)
    ps = ps.at[0:V, 0:C].set(p["wte"])
    ps = ps.at[V:V + T, 0:C].set(p["wpe"])
    ps = ps.at[lay["P_LN1G"], 0:C].set(p["ln1_g"])
    ps = ps.at[lay["P_LN1B"], 0:C].set(p["ln1_b"])
    ps = ps.at[lay["P_LN2G"], 0:C].set(p["ln2_g"])
    ps = ps.at[lay["P_LN2B"], 0:C].set(p["ln2_b"])
    ps = ps.at[lay["P_LNFG"], 0:C].set(p["lnf_g"])
    ps = ps.at[lay["P_LNFB"], 0:C].set(p["lnf_b"])
    ps = ps.at[lay["P_BQKV"], 0:3 * C].set(p["attn_c_attn_b"])
    ps = ps.at[lay["P_BPROJ"], 0:C].set(p["attn_c_proj_b"])
    ps = ps.at[lay["P_BFC"], 0:4 * C].set(p["mlp_c_fc_b"])
    ps = ps.at[lay["P_BPROJ2"], 0:C].set(p["mlp_c_proj_b"])

    # --- spatial-cost slabs: the 5 (W, dist) pairs seen by _extract_layers on a
    #     1-block nanoGPT, flattened + concatenated into two (rows, 128) slabs ---
    mats = [
        p["attn_c_proj_w"],                   # CausalSelfAttention.c_proj
        p["mlp_c_fc_w"],                      # MLP.c_fc
        p["mlp_c_proj_w"],                    # MLP.c_proj
        p["lm_head_w"],                       # lm_head
        p["attn_c_attn_w"][2 * C:3 * C, :],   # value-network rows of c_attn
    ]
    dists = [compute_distance_matrix(m.shape[1], m.shape[0], A, B, D) for m in mats]
    wf = jnp.concatenate([m.reshape(-1) for m in mats]).astype(jnp.float32)
    df = jnp.concatenate([d.reshape(-1) for d in dists]).astype(jnp.float32)
    n_params = int(wf.shape[0])
    pad = (-n_params) % (8 * LANES)
    wf = jnp.pad(wf, (0, pad))
    df = jnp.pad(df, (0, pad))
    return {
        "wslab": wslab, "pslab": ps,
        "cost_w": wf.reshape(-1, LANES), "cost_d": df.reshape(-1, LANES),
        "cost_nparam": float(n_params),
    }


def spatialnet_forward(packed, idx, targets=None):
    """SpatialNet.forward == wrapped (1-block) GPT forward: one fused Pallas kernel
    (embedding gather + transformer block + ln_f + lm_head, and the CE loss when
    targets are provided)."""
    B, T = idx.shape
    idx_col = idx.reshape(B * T, 1).astype(jnp.int32)
    if targets is None:
        logits = fused_gpt_forward(idx_col, packed["wslab"], packed["pslab"], B, T)
        return logits.reshape(B, T, VOCAB), None
    tgt_col = targets.reshape(B * T, 1).astype(jnp.int32)
    logits, loss = fused_gpt_forward(idx_col, packed["wslab"], packed["pslab"], B, T,
                                     tgt_col=tgt_col)
    return logits.reshape(B, T, VOCAB), loss[0, 0]


def spatialnet_get_cost(packed, spatial_cost_scale=1e-4):
    """SpatialNet.get_cost: scale * sum_layers sum(|W| * dist) / total_params.
    The five |W|*dist pairs were flattened into two slabs at pack time -> the kernel
    has exactly 2 input DMAs and one (1,1) output."""
    total = pl.pallas_call(
        _spatial_cost_kernel,
        out_shape=jax.ShapeDtypeStruct((1, 1), jnp.float32),
        in_specs=[_full_spec(packed["cost_w"]), _full_spec(packed["cost_d"])],
        out_specs=pl.BlockSpec((1, 1), lambda: (0, 0)),
    )(packed["cost_w"], packed["cost_d"])[0, 0]
    return spatial_cost_scale * total / packed["cost_nparam"]


if __name__ == "__main__":
    key = jax.random.PRNGKey(0)
    kp, ki, kt = jax.random.split(key, 3)
    params = init_params(kp)
    packed = pack_params(params)
    idx = jax.random.randint(ki, (BATCH, BLOCK_SIZE), 0, VOCAB, dtype=jnp.int32)
    targets = jax.random.randint(kt, (BATCH, BLOCK_SIZE), 0, VOCAB, dtype=jnp.int32)

    forward_jit = jax.jit(spatialnet_forward)
    cost_jit = jax.jit(spatialnet_get_cost)

    logits, loss_none = forward_jit(packed, idx)             # inference path
    logits2, loss = forward_jit(packed, idx, targets)        # training path (fused loss)
    cost = cost_jit(packed)

    jax.block_until_ready((logits, logits2, loss, cost))
    assert logits.shape == (BATCH, BLOCK_SIZE, VOCAB)
    assert logits2.shape == (BATCH, BLOCK_SIZE, VOCAB)
    assert loss_none is None
    assert loss.shape == ()
    assert cost.shape == ()
    print("KERNEL_OK")
</pallas_src>

<mosaic_0001>
module attributes {stable_mosaic.version = 11 : i64} {
  func.func @kernel(%arg0: memref<16x1xi32, #tpu.memory_space<vmem>>, %arg1: memref<256x128xbf16, #tpu.memory_space<vmem>>, %arg2: memref<88x128xf32, #tpu.memory_space<vmem>>, %arg3: memref<16x64xf32, #tpu.memory_space<vmem>>) attributes {dimension_semantics = [], scalar_prefetch = 0 : i64, scratch_operands = 0 : i64, tpu.core_type = #tpu.core_type<tc>} {
    %c0 = arith.constant 0 : index
    %c0_0 = arith.constant 0 : index
    %0 = vector.load %arg0[%c0, %c0_0] : memref<16x1xi32, #tpu.memory_space<vmem>>, vector<16x1xi32>
    %1 = tpu.iota {dimensions = array<i32: 1>} : vector<16x72xi32>
    %2 = tpu.iota {dimensions = array<i32: 0>} : vector<16x72xi32>
    %3 = vector.broadcast %0 : vector<16x1xi32> to vector<16x72xi32>
    %4 = arith.cmpi eq, %1, %3 : vector<16x72xi32>
    %c0_i32 = arith.constant 0 : i32
    %5 = vector.broadcast %c0_i32 : i32 to vector<16x72xi32>
    %6 = arith.subi %2, %5 : vector<16x72xi32>
    %c0_i32_1 = arith.constant 0 : i32
    %7 = vector.broadcast %c0_i32_1 : i32 to vector<16x72xi32>
    %8 = arith.cmpi sge, %6, %7 : vector<16x72xi32>
    %c8_i32 = arith.constant 8 : i32
    %9 = vector.broadcast %c8_i32 : i32 to vector<16x72xi32>
    %10 = arith.cmpi slt, %6, %9 : vector<16x72xi32>
    %11 = arith.andi %8, %10 : vector<16x72xi1>
    %c64_i32 = arith.constant 64 : i32
    %12 = vector.broadcast %c64_i32 : i32 to vector<16x72xi32>
    %13 = arith.addi %12, %6 : vector<16x72xi32>
    %14 = arith.cmpi eq, %1, %13 : vector<16x72xi32>
    %15 = arith.andi %11, %14 : vector<16x72xi1>
    %16 = arith.ori %4, %15 : vector<16x72xi1>
    %c8_i32_2 = arith.constant 8 : i32
    %17 = vector.broadcast %c8_i32_2 : i32 to vector<16x72xi32>
    %18 = arith.subi %2, %17 : vector<16x72xi32>
    %c0_i32_3 = arith.constant 0 : i32
    %19 = vector.broadcast %c0_i32_3 : i32 to vector<16x72xi32>
    %20 = arith.cmpi sge, %18, %19 : vector<16x72xi32>
    %c8_i32_4 = arith.constant 8 : i32
    %21 = vector.broadcast %c8_i32_4 : i32 to vector<16x72xi32>
    %22 = arith.cmpi slt, %18, %21 : vector<16x72xi32>
    %23 = arith.andi %20, %22 : vector<16x72xi1>
    %c64_i32_5 = arith.constant 64 : i32
    %24 = vector.broadcast %c64_i32_5 : i32 to vector<16x72xi32>
    %25 = arith.addi %24, %18 : vector<16x72xi32>
    %26 = arith.cmpi eq, %1, %25 : vector<16x72xi32>
    %27 = arith.andi %23, %26 : vector<16x72xi1>
    %28 = arith.ori %16, %27 : vector<16x72xi1>
    %29 = arith.extui %28 : vector<16x72xi1> to vector<16x72xi32>
    %30 = arith.sitofp %29 : vector<16x72xi32> to vector<16x72xf32>
    %c0_6 = arith.constant 0 : index
    %c0_7 = arith.constant 0 : index
    %31 = vector.load %arg2[%c0_6, %c0_7] : memref<88x128xf32, #tpu.memory_space<vmem>>, vector<72x32xf32>
    %cst = arith.constant dense<0.000000e+00> : vector<16x32xf32>
    %32 = tpu.matmul %30, %31, %cst {dimension_numbers = #tpu.dot_dimension_numbers<[1], [0], [0], [1], [0, 0, 1, 1], [], []>} : vector<16x72xf32>, vector<72x32xf32>, vector<16x32xf32> -> vector<16x32xf32>
    %33 = tpu.iota {dimensions = array<i32: 0>} : vector<16x16xi32>
    %34 = tpu.iota {dimensions = array<i32: 1>} : vector<16x16xi32>
    %false = arith.constant false
    %35 = vector.broadcast %false : i1 to vector<16x16xi1>
    %c0_i32_8 = arith.constant 0 : i32
    %36 = vector.broadcast %c0_i32_8 : i32 to vector<16x16xi32>
    %37 = arith.cmpi sge, %33, %36 : vector<16x16xi32>
    %c8_i32_9 = arith.constant 8 : i32
    %38 = vector.broadcast %c8_i32_9 : i32 to vector<16x16xi32>
    %39 = arith.cmpi slt, %33, %38 : vector<16x16xi32>
    %40 = arith.andi %37, %39 : vector<16x16xi1>
    %c0_i32_10 = arith.constant 0 : i32
    %41 = vector.broadcast %c0_i32_10 : i32 to vector<16x16xi32>
    %42 = arith.cmpi sge, %34, %41 : vector<16x16xi32>
    %43 = arith.andi %40, %42 : vector<16x16xi1>
    %c8_i32_11 = arith.constant 8 : i32
    %44 = vector.broadcast %c8_i32_11 : i32 to vector<16x16xi32>
    %45 = arith.cmpi slt, %34, %44 : vector<16x16xi32>
    %46 = arith.andi %43, %45 : vector<16x16xi1>
    %47 = arith.ori %35, %46 : vector<16x16xi1>
    %c8_i32_12 = arith.constant 8 : i32
    %48 = vector.broadcast %c8_i32_12 : i32 to vector<16x16xi32>
    %49 = arith.cmpi sge, %33, %48 : vector<16x16xi32>
    %c16_i32 = arith.constant 16 : i32
    %50 = vector.broadcast %c16_i32 : i32 to vector<16x16xi32>
    %51 = arith.cmpi slt, %33, %50 : vector<16x16xi32>
    %52 = arith.andi %49, %51 : vector<16x16xi1>
    %c8_i32_13 = arith.constant 8 : i32
    %53 = vector.broadcast %c8_i32_13 : i32 to vector<16x16xi32>
    %54 = arith.cmpi sge, %34, %53 : vector<16x16xi32>
    %55 = arith.andi %52, %54 : vector<16x16xi1>
    %c16_i32_14 = arith.constant 16 : i32
    %56 = vector.broadcast %c16_i32_14 : i32 to vector<16x16xi32>
    %57 = arith.cmpi slt, %34, %56 : vector<16x16xi32>
    %58 = arith.andi %55, %57 : vector<16x16xi1>
    %59 = arith.ori %47, %58 : vector<16x16xi1>
    %60 = arith.cmpi sle, %34, %33 : vector<16x16xi32>
    %61 = arith.andi %59, %60 : vector<16x16xi1>
    %cst_15 = arith.constant 0.000000e+00 : f32
    %cst_16 = arith.constant -1.000000e+30 : f32
    %62 = vector.broadcast %cst_15 : f32 to vector<16x16xf32>
    %63 = vector.broadcast %cst_16 : f32 to vector<16x16xf32>
    %64 = arith.select %61, %62, %63 : vector<16x16xi1>, vector<16x16xf32>
    %c72 = arith.constant 72 : index
    %c0_17 = arith.constant 0 : index
    %65 = vector.load %arg2[%c72, %c0_17] : memref<88x128xf32, #tpu.memory_space<vmem>>, vector<1x32xf32>
    %c73 = arith.constant 73 : index
    %c0_18 = arith.constant 0 : index
    %66 = vector.load %arg2[%c73, %c0_18] : memref<88x128xf32, #tpu.memory_space<vmem>>, vector<1x32xf32>
    %cst_19 = arith.constant dense<0.000000e+00> : vector<16xf32>
    %67 = vector.multi_reduction <add>, %32, %cst_19 [1] : vector<16x32xf32> to vector<16xf32>
    %68 = vector.shape_cast %67 : vector<16xf32> to vector<16x1xf32>
    %cst_20 = arith.constant 3.200000e+01 : f32
    %69 = vector.broadcast %cst_20 : f32 to vector<16x1xf32>
    %70 = arith.divf %68, %69 : vector<16x1xf32>
    %71 = vector.broadcast %70 : vector<16x1xf32> to vector<16x32xf32>
    %72 = arith.subf %32, %71 : vector<16x32xf32>
    %73 = arith.mulf %72, %72 : vector<16x32xf32>
    %cst_21 = arith.constant dense<0.000000e+00> : vector<16xf32>
    %74 = vector.multi_reduction <add>, %73, %cst_21 [1] : vector<16x32xf32> to vector<16xf32>
    %75 = vector.shape_cast %74 : vector<16xf32> to vector<16x1xf32>
    %cst_22 = arith.constant 3.200000e+01 : f32
    %76 = vector.broadcast %cst_22 : f32 to vector<16x1xf32>
    %77 = arith.divf %75, %76 : vector<16x1xf32>
    %78 = vector.broadcast %70 : vector<16x1xf32> to vector<16x32xf32>
    %79 = arith.subf %32, %78 : vector<16x32xf32>
    %cst_23 = arith.constant 9.99999974E-6 : f32
    %80 = vector.broadcast %cst_23 : f32 to vector<16x1xf32>
    %81 = arith.addf %77, %80 : vector<16x1xf32>
    %82 = math.rsqrt %81 : vector<16x1xf32>
    %83 = vector.broadcast %82 : vector<16x1xf32> to vector<16x32xf32>
    %84 = arith.mulf %79, %83 : vector<16x32xf32>
    %85 = vector.broadcast %65 : vector<1x32xf32> to vector<16x32xf32>
    %86 = arith.mulf %84, %85 : vector<16x32xf32>
    %87 = vector.broadcast %66 : vector<1x32xf32> to vector<16x32xf32>
    %88 = arith.addf %86, %87 : vector<16x32xf32>
    %c0_24 = arith.constant 0 : index
    %c0_25 = arith.constant 0 : index
    %89 = vector.load %arg1[%c0_24, %c0_25] : memref<256x128xbf16, #tpu.memory_space<vmem>>, vector<32x96xbf16>
    %90 = arith.truncf %88 : vector<16x32xf32> to vector<16x32xbf16>
    %cst_26 = arith.constant dense<0.000000e+00> : vector<16x96xf32>
    %91 = tpu.matmul %90, %89, %cst_26 {dimension_numbers = #tpu.dot_dimension_numbers<[1], [0], [0], [1], [0, 0, 1, 1], [], []>} : vector<16x32xbf16>, vector<32x96xbf16>, vector<16x96xf32> -> vector<16x96xf32>
    %c78 = arith.constant 78 : index
    %c0_27 = arith.constant 0 : index
    %92 = vector.load %arg2[%c78, %c0_27] : memref<88x128xf32, #tpu.memory_space<vmem>>, vector<1x96xf32>
    %93 = vector.broadcast %92 : vector<1x96xf32> to vector<16x96xf32>
    %94 = arith.addf %91, %93 : vector<16x96xf32>
    %c79 = arith.constant 79 : index
    %c0_28 = arith.constant 0 : index
    %95 = vector.load %arg2[%c79, %c0_28] : memref<88x128xf32, #tpu.memory_space<vmem>>, vector<1x32xf32>
    %96 = vector.broadcast %95 : vector<1x32xf32> to vector<16x32xf32>
    %97 = arith.addf %32, %96 : vector<16x32xf32>
    %98 = vector.extract_strided_slice %94 {offsets = [0, 0], sizes = [16, 8], strides = [1, 1]} : vector<16x96xf32> to vector<16x8xf32>
    %99 = arith.truncf %98 : vector<16x8xf32> to vector<16x8xbf16>
    %100 = vector.extract_strided_slice %94 {offsets = [0, 32], sizes = [16, 8], strides = [1, 1]} : vector<16x96xf32> to vector<16x8xf32>
    %101 = arith.truncf %100 : vector<16x8xf32> to vector<16x8xbf16>
    %102 = vector.extract_strided_slice %94 {offsets = [0, 64], sizes = [16, 8], strides = [1, 1]} : vector<16x96xf32> to vector<16x8xf32>
    %103 = arith.truncf %102 : vector<16x8xf32> to vector<16x8xbf16>
    %cst_29 = arith.constant dense<0.000000e+00> : vector<16x16xf32>
    %104 = tpu.matmul %99, %101, %cst_29 {dimension_numbers = #tpu.dot_dimension_numbers<[1], [1], [0], [0], [0, 0, 1, 0], [], []>} : vector<16x8xbf16>, vector<16x8xbf16>, vector<16x16xf32> -> vector<16x16xf32>
    %cst_30 = arith.constant 0.353553385 : f32
    %105 = vector.broadcast %cst_30 : f32 to vector<16x16xf32>
    %106 = arith.mulf %104, %105 : vector<16x16xf32>
    %107 = arith.addf %106, %64 : vector<16x16xf32>
    %cst_31 = arith.constant dense<0xFF800000> : vector<16xf32>
    %108 = vector.multi_reduction <maximumf>, %107, %cst_31 [1] : vector<16x16xf32> to vector<16xf32>
    %109 = vector.shape_cast %108 : vector<16xf32> to vector<16x1xf32>
    %110 = vector.broadcast %109 : vector<16x1xf32> to vector<16x16xf32>
    %111 = arith.subf %107, %110 : vector<16x16xf32>
    %112 = math.exp %111 : vector<16x16xf32>
    %cst_32 = arith.constant dense<0.000000e+00> : vector<16xf32>
    %113 = vector.multi_reduction <add>, %112, %cst_32 [1] : vector<16x16xf32> to vector<16xf32>
    %114 = vector.shape_cast %113 : vector<16xf32> to vector<16x1xf32>
    %115 = tpu.reciprocal %114 {approx = true} : vector<16x1xf32> -> vector<16x1xf32>
    %116 = vector.broadcast %115 : vector<16x1xf32> to vector<16x16xf32>
    %117 = arith.mulf %112, %116 : vector<16x16xf32>
    %118 = arith.truncf %117 : vector<16x16xf32> to vector<16x16xbf16>
    %cst_33 = arith.constant dense<0.000000e+00> : vector<16x8xf32>
    %119 = tpu.matmul %118, %103, %cst_33 {dimension_numbers = #tpu.dot_dimension_numbers<[1], [0], [0], [1], [0, 0, 1, 1], [], []>} : vector<16x16xbf16>, vector<16x8xbf16>, vector<16x8xf32> -> vector<16x8xf32>
    %c224 = arith.constant 224 : index
    %c0_34 = arith.constant 0 : index
    %120 = vector.load %arg1[%c224, %c0_34] : memref<256x128xbf16, #tpu.memory_space<vmem>>, vector<8x32xbf16>
    %121 = arith.truncf %119 : vector<16x8xf32> to vector<16x8xbf16>
    %cst_35 = arith.constant dense<0.000000e+00> : vector<16x32xf32>
    %122 = tpu.matmul %121, %120, %cst_35 {dimension_numbers = #tpu.dot_dimension_numbers<[1], [0], [0], [1], [0, 0, 1, 1], [], []>} : vector<16x8xbf16>, vector<8x32xbf16>, vector<16x32xf32> -> vector<16x32xf32>
    %123 = arith.addf %97, %122 : vector<16x32xf32>
    %124 = vector.extract_strided_slice %94 {offsets = [0, 8], sizes = [16, 8], strides = [1, 1]} : vector<16x96xf32> to vector<16x8xf32>
    %125 = arith.truncf %124 : vector<16x8xf32> to vector<16x8xbf16>
    %126 = vector.extract_strided_slice %94 {offsets = [0, 40], sizes = [16, 8], strides = [1, 1]} : vector<16x96xf32> to vector<16x8xf32>
    %127 = arith.truncf %126 : vector<16x8xf32> to vector<16x8xbf16>
    %128 = vector.extract_strided_slice %94 {offsets = [0, 72], sizes = [16, 8], strides = [1, 1]} : vector<16x96xf32> to vector<16x8xf32>
    %129 = arith.truncf %128 : vector<16x8xf32> to vector<16x8xbf16>
    %cst_36 = arith.constant dense<0.000000e+00> : vector<16x16xf32>
    %130 = tpu.matmul %125, %127, %cst_36 {dimension_numbers = #tpu.dot_dimension_numbers<[1], [1], [0], [0], [0, 0, 1, 0], [], []>} : vector<16x8xbf16>, vector<16x8xbf16>, vector<16x16xf32> -> vector<16x16xf32>
    %cst_37 = arith.constant 0.353553385 : f32
    %131 = vector.broadcast %cst_37 : f32 to vector<16x16xf32>
    %132 = arith.mulf %130, %131 : vector<16x16xf32>
    %133 = arith.addf %132, %64 : vector<16x16xf32>
    %cst_38 = arith.constant dense<0xFF800000> : vector<16xf32>
    %134 = vector.multi_reduction <maximumf>, %133, %cst_38 [1] : vector<16x16xf32> to vector<16xf32>
    %135 = vector.shape_cast %134 : vector<16xf32> to vector<16x1xf32>
    %136 = vector.broadcast %135 : vector<16x1xf32> to vector<16x16xf32>
    %137 = arith.subf %133, %136 : vector<16x16xf32>
    %138 = math.exp %137 : vector<16x16xf32>
    %cst_39 = arith.constant dense<0.000000e+00> : vector<16xf32>
    %139 = vector.multi_reduction <add>, %138, %cst_39 [1] : vector<16x16xf32> to vector<16xf32>
    %140 = vector.shape_cast %139 : vector<16xf32> to vector<16x1xf32>
    %141 = tpu.reciprocal %140 {approx = true} : vector<16x1xf32> -> vector<16x1xf32>
    %142 = vector.broadcast %141 : vector<16x1xf32> to vector<16x16xf32>
    %143 = arith.mulf %138, %142 : vector<16x16xf32>
    %144 = arith.truncf %143 : vector<16x16xf32> to vector<16x16xbf16>
    %cst_40 = arith.constant dense<0.000000e+00> : vector<16x8xf32>
    %145 = tpu.matmul %144, %129, %cst_40 {dimension_numbers = #tpu.dot_dimension_numbers<[1], [0], [0], [1], [0, 0, 1, 1], [], []>} : vector<16x16xbf16>, vector<16x8xbf16>, vector<16x8xf32> -> vector<16x8xf32>
    %c232 = arith.constant 232 : index
    %c0_41 = arith.constant 0 : index
    %146 = vector.load %arg1[%c232, %c0_41] : memref<256x128xbf16, #tpu.memory_space<vmem>>, vector<8x32xbf16>
    %147 = arith.truncf %145 : vector<16x8xf32> to vector<16x8xbf16>
    %cst_42 = arith.constant dense<0.000000e+00> : vector<16x32xf32>
    %148 = tpu.matmul %147, %146, %cst_42 {dimension_numbers = #tpu.dot_dimension_numbers<[1], [0], [0], [1], [0, 0, 1, 1], [], []>} : vector<16x8xbf16>, vector<8x32xbf16>, vector<16x32xf32> -> vector<16x32xf32>
    %149 = arith.addf %123, %148 : vector<16x32xf32>
    %150 = vector.extract_strided_slice %94 {offsets = [0, 16], sizes = [16, 8], strides = [1, 1]} : vector<16x96xf32> to vector<16x8xf32>
    %151 = arith.truncf %150 : vector<16x8xf32> to vector<16x8xbf16>
    %152 = vector.extract_strided_slice %94 {offsets = [0, 48], sizes = [16, 8], strides = [1, 1]} : vector<16x96xf32> to vector<16x8xf32>
    %153 = arith.truncf %152 : vector<16x8xf32> to vector<16x8xbf16>
    %154 = vector.extract_strided_slice %94 {offsets = [0, 80], sizes = [16, 8], strides = [1, 1]} : vector<16x96xf32> to vector<16x8xf32>
    %155 = arith.truncf %154 : vector<16x8xf32> to vector<16x8xbf16>
    %cst_43 = arith.constant dense<0.000000e+00> : vector<16x16xf32>
    %156 = tpu.matmul %151, %153, %cst_43 {dimension_numbers = #tpu.dot_dimension_numbers<[1], [1], [0], [0], [0, 0, 1, 0], [], []>} : vector<16x8xbf16>, vector<16x8xbf16>, vector<16x16xf32> -> vector<16x16xf32>
    %cst_44 = arith.constant 0.353553385 : f32
    %157 = vector.broadcast %cst_44 : f32 to vector<16x16xf32>
    %158 = arith.mulf %156, %157 : vector<16x16xf32>
    %159 = arith.addf %158, %64 : vector<16x16xf32>
    %cst_45 = arith.constant dense<0xFF800000> : vector<16xf32>
    %160 = vector.multi_reduction <maximumf>, %159, %cst_45 [1] : vector<16x16xf32> to vector<16xf32>
    %161 = vector.shape_cast %160 : vector<16xf32> to vector<16x1xf32>
    %162 = vector.broadcast %161 : vector<16x1xf32> to vector<16x16xf32>
    %163 = arith.subf %159, %162 : vector<16x16xf32>
    %164 = math.exp %163 : vector<16x16xf32>
    %cst_46 = arith.constant dense<0.000000e+00> : vector<16xf32>
    %165 = vector.multi_reduction <add>, %164, %cst_46 [1] : vector<16x16xf32> to vector<16xf32>
    %166 = vector.shape_cast %165 : vector<16xf32> to vector<16x1xf32>
    %167 = tpu.reciprocal %166 {approx = true} : vector<16x1xf32> -> vector<16x1xf32>
    %168 = vector.broadcast %167 : vector<16x1xf32> to vector<16x16xf32>
    %169 = arith.mulf %164, %168 : vector<16x16xf32>
    %170 = arith.truncf %169 : vector<16x16xf32> to vector<16x16xbf16>
    %cst_47 = arith.constant dense<0.000000e+00> : vector<16x8xf32>
    %171 = tpu.matmul %170, %155, %cst_47 {dimension_numbers = #tpu.dot_dimension_numbers<[1], [0], [0], [1], [0, 0, 1, 1], [], []>} : vector<16x16xbf16>, vector<16x8xbf16>, vector<16x8xf32> -> vector<16x8xf32>
    %c240 = arith.constant 240 : index
    %c0_48 = arith.constant 0 : index
    %172 = vector.load %arg1[%c240, %c0_48] : memref<256x128xbf16, #tpu.memory_space<vmem>>, vector<8x32xbf16>
    %173 = arith.truncf %171 : vector<16x8xf32> to vector<16x8xbf16>
    %cst_49 = arith.constant dense<0.000000e+00> : vector<16x32xf32>
    %174 = tpu.matmul %173, %172, %cst_49 {dimension_numbers = #tpu.dot_dimension_numbers<[1], [0], [0], [1], [0, 0, 1, 1], [], []>} : vector<16x8xbf16>, vector<8x32xbf16>, vector<16x32xf32> -> vector<16x32xf32>
    %175 = arith.addf %149, %174 : vector<16x32xf32>
    %176 = vector.extract_strided_slice %94 {offsets = [0, 24], sizes = [16, 8], strides = [1, 1]} : vector<16x96xf32> to vector<16x8xf32>
    %177 = arith.truncf %176 : vector<16x8xf32> to vector<16x8xbf16>
    %178 = vector.extract_strided_slice %94 {offsets = [0, 56], sizes = [16, 8], strides = [1, 1]} : vector<16x96xf32> to vector<16x8xf32>
    %179 = arith.truncf %178 : vector<16x8xf32> to vector<16x8xbf16>
    %180 = vector.extract_strided_slice %94 {offsets = [0, 88], sizes = [16, 8], strides = [1, 1]} : vector<16x96xf32> to vector<16x8xf32>
    %181 = arith.truncf %180 : vector<16x8xf32> to vector<16x8xbf16>
    %cst_50 = arith.constant dense<0.000000e+00> : vector<16x16xf32>
    %182 = tpu.matmul %177, %179, %cst_50 {dimension_numbers = #tpu.dot_dimension_numbers<[1], [1], [0], [0], [0, 0, 1, 0], [], []>} : vector<16x8xbf16>, vector<16x8xbf16>, vector<16x16xf32> -> vector<16x16xf32>
    %cst_51 = arith.constant 0.353553385 : f32
    %183 = vector.broadcast %cst_51 : f32 to vector<16x16xf32>
    %184 = arith.mulf %182, %183 : vector<16x16xf32>
    %185 = arith.addf %184, %64 : vector<16x16xf32>
    %cst_52 = arith.constant dense<0xFF800000> : vector<16xf32>
    %186 = vector.multi_reduction <maximumf>, %185, %cst_52 [1] : vector<16x16xf32> to vector<16xf32>
    %187 = vector.shape_cast %186 : vector<16xf32> to vector<16x1xf32>
    %188 = vector.broadcast %187 : vector<16x1xf32> to vector<16x16xf32>
    %189 = arith.subf %185, %188 : vector<16x16xf32>
    %190 = math.exp %189 : vector<16x16xf32>
    %cst_53 = arith.constant dense<0.000000e+00> : vector<16xf32>
    %191 = vector.multi_reduction <add>, %190, %cst_53 [1] : vector<16x16xf32> to vector<16xf32>
    %192 = vector.shape_cast %191 : vector<16xf32> to vector<16x1xf32>
    %193 = tpu.reciprocal %192 {approx = true} : vector<16x1xf32> -> vector<16x1xf32>
    %194 = vector.broadcast %193 : vector<16x1xf32> to vector<16x16xf32>
    %195 = arith.mulf %190, %194 : vector<16x16xf32>
    %196 = arith.truncf %195 : vector<16x16xf32> to vector<16x16xbf16>
    %cst_54 = arith.constant dense<0.000000e+00> : vector<16x8xf32>
    %197 = tpu.matmul %196, %181, %cst_54 {dimension_numbers = #tpu.dot_dimension_numbers<[1], [0], [0], [1], [0, 0, 1, 1], [], []>} : vector<16x16xbf16>, vector<16x8xbf16>, vector<16x8xf32> -> vector<16x8xf32>
    %c248 = arith.constant 248 : index
    %c0_55 = arith.constant 0 : index
    %198 = vector.load %arg1[%c248, %c0_55] : memref<256x128xbf16, #tpu.memory_space<vmem>>, vector<8x32xbf16>
    %199 = arith.truncf %197 : vector<16x8xf32> to vector<16x8xbf16>
    %cst_56 = arith.constant dense<0.000000e+00> : vector<16x32xf32>
    %200 = tpu.matmul %199, %198, %cst_56 {dimension_numbers = #tpu.dot_dimension_numbers<[1], [0], [0], [1], [0, 0, 1, 1], [], []>} : vector<16x8xbf16>, vector<8x32xbf16>, vector<16x32xf32> -> vector<16x32xf32>
    %201 = arith.addf %175, %200 : vector<16x32xf32>
    %c74 = arith.constant 74 : index
    %c0_57 = arith.constant 0 : index
    %202 = vector.load %arg2[%c74, %c0_57] : memref<88x128xf32, #tpu.memory_space<vmem>>, vector<1x32xf32>
    %c75 = arith.constant 75 : index
    %c0_58 = arith.constant 0 : index
    %203 = vector.load %arg2[%c75, %c0_58] : memref<88x128xf32, #tpu.memory_space<vmem>>, vector<1x32xf32>
    %cst_59 = arith.constant dense<0.000000e+00> : vector<16xf32>
    %204 = vector.multi_reduction <add>, %201, %cst_59 [1] : vector<16x32xf32> to vector<16xf32>
    %205 = vector.shape_cast %204 : vector<16xf32> to vector<16x1xf32>
    %cst_60 = arith.constant 3.200000e+01 : f32
    %206 = vector.broadcast %cst_60 : f32 to vector<16x1xf32>
    %207 = arith.divf %205, %206 : vector<16x1xf32>
    %208 = vector.broadcast %207 : vector<16x1xf32> to vector<16x32xf32>
    %209 = arith.subf %201, %208 : vector<16x32xf32>
    %210 = arith.mulf %209, %209 : vector<16x32xf32>
    %cst_61 = arith.constant dense<0.000000e+00> : vector<16xf32>
    %211 = vector.multi_reduction <add>, %210, %cst_61 [1] : vector<16x32xf32> to vector<16xf32>
    %212 = vector.shape_cast %211 : vector<16xf32> to vector<16x1xf32>
    %cst_62 = arith.constant 3.200000e+01 : f32
    %213 = vector.broadcast %cst_62 : f32 to vector<16x1xf32>
    %214 = arith.divf %212, %213 : vector<16x1xf32>
    %215 = vector.broadcast %207 : vector<16x1xf32> to vector<16x32xf32>
    %216 = arith.subf %201, %215 : vector<16x32xf32>
    %cst_63 = arith.constant 9.99999974E-6 : f32
    %217 = vector.broadcast %cst_63 : f32 to vector<16x1xf32>
    %218 = arith.addf %214, %217 : vector<16x1xf32>
    %219 = math.rsqrt %218 : vector<16x1xf32>
    %220 = vector.broadcast %219 : vector<16x1xf32> to vector<16x32xf32>
    %221 = arith.mulf %216, %220 : vector<16x32xf32>
    %222 = vector.broadcast %202 : vector<1x32xf32> to vector<16x32xf32>
    %223 = arith.mulf %221, %222 : vector<16x32xf32>
    %224 = vector.broadcast %203 : vector<1x32xf32> to vector<16x32xf32>
    %225 = arith.addf %223, %224 : vector<16x32xf32>
    %c32 = arith.constant 32 : index
    %c0_64 = arith.constant 0 : index
    %226 = vector.load %arg1[%c32, %c0_64] : memref<256x128xbf16, #tpu.memory_space<vmem>>, vector<32x128xbf16>
    %227 = arith.truncf %225 : vector<16x32xf32> to vector<16x32xbf16>
    %cst_65 = arith.constant dense<0.000000e+00> : vector<16x128xf32>
    %228 = tpu.matmul %227, %226, %cst_65 {dimension_numbers = #tpu.dot_dimension_numbers<[1], [0], [0], [1], [0, 0, 1, 1], [], []>} : vector<16x32xbf16>, vector<32x128xbf16>, vector<16x128xf32> -> vector<16x128xf32>
    %c80 = arith.constant 80 : index
    %c0_66 = arith.constant 0 : index
    %229 = vector.load %arg2[%c80, %c0_66] : memref<88x128xf32, #tpu.memory_space<vmem>>, vector<1x128xf32>
    %230 = vector.broadcast %229 : vector<1x128xf32> to vector<16x128xf32>
    %231 = arith.addf %228, %230 : vector<16x128xf32>
    %cst_67 = arith.constant 5.000000e-01 : f32
    %232 = vector.broadcast %cst_67 : f32 to vector<16x128xf32>
    %233 = arith.mulf %232, %231 : vector<16x128xf32>
    %cst_68 = arith.constant 0.707106769 : f32
    %234 = vector.broadcast %cst_68 : f32 to vector<16x128xf32>
    %235 = arith.mulf %231, %234 : vector<16x128xf32>
    %cst_69 = arith.constant 0.000000e+00 : f32
    %236 = vector.broadcast %cst_69 : f32 to vector<16x128xf32>
    %237 = arith.cmpf oge, %235, %236 : vector<16x128xf32>
    %cst_70 = arith.constant 1.000000e+00 : f32
    %cst_71 = arith.constant -1.000000e+00 : f32
    %238 = vector.broadcast %cst_70 : f32 to vector<16x128xf32>
    %239 = vector.broadcast %cst_71 : f32 to vector<16x128xf32>
    %240 = arith.select %237, %238, %239 : vector<16x128xi1>, vector<16x128xf32>
    %241 = math.absf %235 : vector<16x128xf32>
    %cst_72 = arith.constant 0.327591091 : f32
    %242 = vector.broadcast %cst_72 : f32 to vector<16x128xf32>
    %243 = arith.mulf %242, %241 : vector<16x128xf32>
    %cst_73 = arith.constant 1.000000e+00 : f32
    %244 = vector.broadcast %cst_73 : f32 to vector<16x128xf32>
    %245 = arith.addf %244, %243 : vector<16x128xf32>
    %cst_74 = arith.constant 1.000000e+00 : f32
    %246 = vector.broadcast %cst_74 : f32 to vector<16x128xf32>
    %247 = arith.divf %246, %245 : vector<16x128xf32>
    %cst_75 = arith.constant 1.06140542 : f32
    %248 = vector.broadcast %cst_75 : f32 to vector<16x128xf32>
    %249 = arith.mulf %248, %247 : vector<16x128xf32>
    %cst_76 = arith.constant -1.45315206 : f32
    %250 = vector.broadcast %cst_76 : f32 to vector<16x128xf32>
    %251 = arith.addf %249, %250 : vector<16x128xf32>
    %252 = arith.mulf %251, %247 : vector<16x128xf32>
    %cst_77 = arith.constant 1.42141378 : f32
    %253 = vector.broadcast %cst_77 : f32 to vector<16x128xf32>
    %254 = arith.addf %252, %253 : vector<16x128xf32>
    %255 = arith.mulf %254, %247 : vector<16x128xf32>
    %cst_78 = arith.constant -0.284496725 : f32
    %256 = vector.broadcast %cst_78 : f32 to vector<16x128xf32>
    %257 = arith.addf %255, %256 : vector<16x128xf32>
    %258 = arith.mulf %257, %247 : vector<16x128xf32>
    %cst_79 = arith.constant 0.254829586 : f32
    %259 = vector.broadcast %cst_79 : f32 to vector<16x128xf32>
    %260 = arith.addf %258, %259 : vector<16x128xf32>
    %261 = arith.mulf %260, %247 : vector<16x128xf32>
    %cst_80 = arith.constant 0.000000e+00 : f32
    %262 = vector.broadcast %cst_80 : f32 to vector<16x128xf32>
    %263 = arith.subf %262, %241 : vector<16x128xf32>
    %264 = arith.mulf %263, %241 : vector<16x128xf32>
    %265 = math.exp %264 : vector<16x128xf32>
    %266 = arith.mulf %261, %265 : vector<16x128xf32>
    %cst_81 = arith.constant 1.000000e+00 : f32
    %267 = vector.broadcast %cst_81 : f32 to vector<16x128xf32>
    %268 = arith.subf %267, %266 : vector<16x128xf32>
    %269 = arith.mulf %240, %268 : vector<16x128xf32>
    %cst_82 = arith.constant 1.000000e+00 : f32
    %270 = vector.broadcast %cst_82 : f32 to vector<16x128xf32>
    %271 = arith.addf %270, %269 : vector<16x128xf32>
    %272 = arith.mulf %233, %271 : vector<16x128xf32>
    %c64 = arith.constant 64 : index
    %c0_83 = arith.constant 0 : index
    %273 = vector.load %arg1[%c64, %c0_83] : memref<256x128xbf16, #tpu.memory_space<vmem>>, vector<128x32xbf16>
    %274 = arith.truncf %272 : vector<16x128xf32> to vector<16x128xbf16>
    %cst_84 = arith.constant dense<0.000000e+00> : vector<16x32xf32>
    %275 = tpu.matmul %274, %273, %cst_84 {dimension_numbers = #tpu.dot_dimension_numbers<[1], [0], [0], [1], [0, 0, 1, 1], [], []>} : vector<16x128xbf16>, vector<128x32xbf16>, vector<16x32xf32> -> vector<16x32xf32>
    %276 = arith.addf %201, %275 : vector<16x32xf32>
    %c81 = arith.constant 81 : index
    %c0_85 = arith.constant 0 : index
    %277 = vector.load %arg2[%c81, %c0_85] : memref<88x128xf32, #tpu.memory_space<vmem>>, vector<1x32xf32>
    %278 = vector.broadcast %277 : vector<1x32xf32> to vector<16x32xf32>
    %279 = arith.addf %276, %278 : vector<16x32xf32>
    %c76 = arith.constant 76 : index
    %c0_86 = arith.constant 0 : index
    %280 = vector.load %arg2[%c76, %c0_86] : memref<88x128xf32, #tpu.memory_space<vmem>>, vector<1x32xf32>
    %c77 = arith.constant 77 : index
    %c0_87 = arith.constant 0 : index
    %281 = vector.load %arg2[%c77, %c0_87] : memref<88x128xf32, #tpu.memory_space<vmem>>, vector<1x32xf32>
    %cst_88 = arith.constant dense<0.000000e+00> : vector<16xf32>
    %282 = vector.multi_reduction <add>, %279, %cst_88 [1] : vector<16x32xf32> to vector<16xf32>
    %283 = vector.shape_cast %282 : vector<16xf32> to vector<16x1xf32>
    %cst_89 = arith.constant 3.200000e+01 : f32
    %284 = vector.broadcast %cst_89 : f32 to vector<16x1xf32>
    %285 = arith.divf %283, %284 : vector<16x1xf32>
    %286 = vector.broadcast %285 : vector<16x1xf32> to vector<16x32xf32>
    %287 = arith.subf %279, %286 : vector<16x32xf32>
    %288 = arith.mulf %287, %287 : vector<16x32xf32>
    %cst_90 = arith.constant dense<0.000000e+00> : vector<16xf32>
    %289 = vector.multi_reduction <add>, %288, %cst_90 [1] : vector<16x32xf32> to vector<16xf32>
    %290 = vector.shape_cast %289 : vector<16xf32> to vector<16x1xf32>
    %cst_91 = arith.constant 3.200000e+01 : f32
    %291 = vector.broadcast %cst_91 : f32 to vector<16x1xf32>
    %292 = arith.divf %290, %291 : vector<16x1xf32>
    %293 = vector.broadcast %285 : vector<16x1xf32> to vector<16x32xf32>
    %294 = arith.subf %279, %293 : vector<16x32xf32>
    %cst_92 = arith.constant 9.99999974E-6 : f32
    %295 = vector.broadcast %cst_92 : f32 to vector<16x1xf32>
    %296 = arith.addf %292, %295 : vector<16x1xf32>
    %297 = math.rsqrt %296 : vector<16x1xf32>
    %298 = vector.broadcast %297 : vector<16x1xf32> to vector<16x32xf32>
    %299 = arith.mulf %294, %298 : vector<16x32xf32>
    %300 = vector.broadcast %280 : vector<1x32xf32> to vector<16x32xf32>
    %301 = arith.mulf %299, %300 : vector<16x32xf32>
    %302 = vector.broadcast %281 : vector<1x32xf32> to vector<16x32xf32>
    %303 = arith.addf %301, %302 : vector<16x32xf32>
    %c192 = arith.constant 192 : index
    %c0_93 = arith.constant 0 : index
    %304 = vector.load %arg1[%c192, %c0_93] : memref<256x128xbf16, #tpu.memory_space<vmem>>, vector<32x64xbf16>
    %305 = arith.truncf %303 : vector<16x32xf32> to vector<16x32xbf16>
    %cst_94 = arith.constant dense<0.000000e+00> : vector<16x64xf32>
    %306 = tpu.matmul %305, %304, %cst_94 {dimension_numbers = #tpu.dot_dimension_numbers<[1], [0], [0], [1], [0, 0, 1, 1], [], []>} : vector<16x32xbf16>, vector<32x64xbf16>, vector<16x64xf32> -> vector<16x64xf32>
    %c0_95 = arith.constant 0 : index
    %c0_96 = arith.constant 0 : index
    %307 = vector.load %arg3[%c0_95, %c0_96] : memref<16x64xf32, #tpu.memory_space<vmem>>, vector<16x64xf32>
    tpu.vector_store %arg3[%c0_95, %c0_96], %306 {strides = array<i32>} : memref<16x64xf32, #tpu.memory_space<vmem>>, vector<16x64xf32>,
    return
  }
}

</mosaic_0001>

<llo_original>
// kernel: spatialnet_forward.1
$region0: #{spatialnet_forward.1}
  #allocation0 [shape = 'u32[]', space=smem, size = 0x4, offset = 0x4, fixed_abs, tag = 'smem constant byte address 0x4 - core index']
  #allocation1 [shape = 'u32[144,128]{1,0:T(1,128)}', space=vmem, size = 0x12000, scoped, tag = 'internal scratch']
  %s0 = inlined_call_operand.vmem [shape: s32[16,1], index: 0, kind: input, shape index: {}]
  %s1 = inlined_call_operand.hbm [shape: bf16[256,128], index: 1, kind: input, shape index: {}]
  %s2 = inlined_call_operand.hbm [shape: f32[88,128], index: 2, kind: input, shape index: {}]
  %s3 = inlined_call_operand.hbm [shape: f32[16,64], index: 3, kind: output, shape index: {}]
  %s4 = sld [smem:[#allocation0]]
  $region30: #{spatialnet_forward.1} parent=0
    _
  %s6 = ssub.s32 1, %s4
  %s7 = scalar_select 0, %s6, %s4
  $region1: #{spatialnet_forward.1} parent=0
    #allocation2 [shape = 'u8[65536]{0}', space=vmem, size = 0x10000, scoped, tag = 'input window, operand 1, single buffered']
    #allocation3 [shape = 's32[1]{0}', space=sflag, size = 0x4, scoped, tag = 'scoped memory for spatialnet_forward.1']
    #allocation4 [shape = 's32[1]{0}', space=sflag, size = 0x4, scoped, tag = 'scoped memory for spatialnet_forward.1']
    #allocation5 [shape = 'u8[45056]{0}', space=vmem, size = 0xb000, scoped, tag = 'input window, operand 2, single buffered']
    #allocation6 [shape = 's32[1]{0}', space=sflag, size = 0x4, scoped, tag = 'scoped memory for spatialnet_forward.1']
    #allocation7 [shape = 'u8[8192]{0}', space=vmem, size = 0x2000, scoped, tag = 'output window, operand 0, single buffered']
    %8 = vsyncpa [#allocation3], 0
    %9 = vsyncpa [#allocation6], 0
    %10 = vsyncpa [#allocation4], 0
    // Predicated region
    $region2: #{spatialnet_forward.1} parent=1 // pred_check
      _
    $region3: #{spatialnet_forward.1} parent=1 // pred_check_branch
      %12 = sbr.rel (0) target = $region5
    $region4: #{spatialnet_forward.1} parent=1 // pred_region
      _
    $region5: #{spatialnet_forward.1} parent=1 // pred_fallthru
      _
    // Predicated region
    $region6: #{spatialnet_forward.1} parent=1 // pred_check
      _
    $region7: #{spatialnet_forward.1} parent=1 // pred_check_branch
      %14 = sbr.rel (0) target = $region9
    $region8: #{spatialnet_forward.1} parent=1 // pred_region
      %s16 = ssub.s32 2048, 2048
      %17 = vsyncadd [#allocation3], %s16
      %s18 = sshll.u32 [#allocation2], 4
      %s19 = int_to_ptr.vmem [resolvable:$true] %s18
      %24 = dma.hbm_to_vmem [thread:$0]  %s1, 2048, %s19, [#allocation3], 64, 64, 4
    $region9: #{spatialnet_forward.1} parent=1 // pred_fallthru
      _
    // Predicated region
    $region10: #{spatialnet_forward.1} parent=1 // pred_check
      _
    $region11: #{spatialnet_forward.1} parent=1 // pred_check_branch
      %26 = sbr.rel (0) target = $region13
    $region12: #{spatialnet_forward.1} parent=1 // pred_region
      %s28 = ssub.s32 1408, 1408
      %29 = vsyncadd [#allocation6], %s28
      %s30 = sshll.u32 [#allocation5], 4
      %s31 = int_to_ptr.vmem [resolvable:$true] %s30
      %36 = dma.hbm_to_vmem [thread:$0]  %s2, 1408, %s31, [#allocation6], 128, 128, 8
    $region13: #{spatialnet_forward.1} parent=1 // pred_fallthru
      _
    // Predicated region
    $region14: #{spatialnet_forward.1} parent=1 // pred_check
      _
    $region15: #{spatialnet_forward.1} parent=1 // pred_check_branch
      %38 = sbr.rel (0) target = $region17
    $region16: #{spatialnet_forward.1} parent=1 // pred_region
      %39 = dma.done [#allocation3], 2048
    $region17: #{spatialnet_forward.1} parent=1 // pred_fallthru
      _
    // Predicated region
    $region18: #{spatialnet_forward.1} parent=1 // pred_check
      _
    $region19: #{spatialnet_forward.1} parent=1 // pred_check_branch
      %41 = sbr.rel (0) target = $region21
    $region20: #{spatialnet_forward.1} parent=1 // pred_region
      %42 = dma.done [#allocation6], 1408
    $region21: #{spatialnet_forward.1} parent=1 // pred_fallthru
      _
    %v44 = vld [vmem:[%s0] sm:$0xff]
    %v45 = vld [vmem:[%s0 + $0x8] sm:$0xff]
    %v46 = vlaneseq
    %v47 = vand.u32 %v46, 127
    %v48 = vlaneseq
    %v49 = vshrl.u32 %v48, 7
    %v50 = vadd.s32 %v49, 8
    %51 = vset.pattern.permute.xlu0 0
    %52 = vperm.xlu0 %51, %v44
    %v53 = vpop.permute.xlu0 %52
    %54 = vset.pattern.permute.xlu0 0
    %55 = vperm.xlu0 %54, %v45
    %v56 = vpop.permute.xlu0 %55
    %vm57 = vcmp.eq.s32.totalorder %v47, %v53
    %vm58 = vcmp.eq.s32.totalorder %v47, %v56
    %vm59 = vcmp.ge.s32.totalorder %v49, 0
    %vm60 = vcmp.ge.s32.totalorder %v50, 0
    %vm61 = vcmp.lt.s32.totalorder %v49, 8
    %vm62 = vcmp.lt.s32.totalorder %v50, 8
    %vm63 = vmand %vm59, %vm61
    %vm64 = vmand %vm60, %vm62
    %v65 = vadd.s32 %v49, 64
    %v66 = vadd.s32 %v50, 64
    %vm67 = vcmp.eq.s32.totalorder %v47, %v65
    %vm68 = vcmp.eq.s32.totalorder %v47, %v66
    %vm69 = vmand %vm63, %vm67
    %vm70 = vmand %vm64, %vm68
    %vm71 = vmor %vm57, %vm69
    %vm72 = vmor %vm58, %vm70
    %v73 = vsub.s32 %v49, 8
    %vm74 = vcmp.ge.s32.totalorder %v73, 0
    %vm75 = vcmp.lt.s32.totalorder %v73, 8
    %vm76 = vmand %vm74, %vm75
    %v77 = vadd.s32 %v73, 64
    %vm78 = vcmp.eq.s32.totalorder %v47, %v77
    %vm79 = vmand %vm76, %vm78
    %vm80 = vmor %vm71, %vm79
    %vm81 = vmor %vm72, %vm69
    %v82 = vsel %vm80, 1, 0
    %v83 = vsel %vm81, 1, 0
    %v84 = vcvt.s32.f32 %v82
    %v85 = vcvt.s32.f32 %v83
    %v86 = vld [vmem:[#allocation5] sm:$0xff]
    %v87 = vld [vmem:[#allocation5 + $0x8] sm:$0xff]
    %v88 = vld [vmem:[#allocation5 + $0x10] sm:$0xff]
    %v89 = vld [vmem:[#allocation5 + $0x18] sm:$0xff]
    %v90 = vld [vmem:[#allocation5 + $0x20] sm:$0xff]
    %v91 = vld [vmem:[#allocation5 + $0x28] sm:$0xff]
    %v92 = vld [vmem:[#allocation5 + $0x30] sm:$0xff]
    %v93 = vld [vmem:[#allocation5 + $0x38] sm:$0xff]
    %v94 = vld [vmem:[#allocation5 + $0x40] sm:$0xff]
    %vm95 = vcmask 588800
    %v97 = vsel %vm95, %v84, 0
    %v100 = vsel %vm95, %v85, 0
    %102 = vmatprep.subr.mxu0 0.0
    %103 = vmatpush1.msra.mxu0 %v86
    %104 = vmatprep.subr.mxu0 0.0
    %105 = vmatpush1.msra.mxu0 %v87
    %106 = vmatprep.subr.mxu0 0.0
    %107 = vmatpush1.msra.mxu0 %v88
    %108 = vmatprep.subr.mxu0 0.0
    %109 = vmatpush1.msra.mxu0 %v89
    %110 = vmatprep.subr.mxu0 0.0
    %111 = vmatpush1.msra.mxu0 %v90
    %112 = vmatprep.subr.mxu0 0.0
    %113 = vmatpush1.msra.mxu0 %v91
    %114 = vmatprep.subr.mxu0 0.0
    %115 = vmatpush1.msra.mxu0 %v92
    %116 = vmatprep.subr.mxu0 0.0
    %117 = vmatpush1.msra.mxu0 %v93
    %118 = vmatprep.subr.mxu0 0.0
    %119 = vmatpush1.msra.mxu0 %v94
    %120 = vmatprep.subr.mxu0 0.0
    %121 = vmatpush1.msra.mxu0 0.0
    %122 = vmatprep.subr.mxu0 0.0
    %123 = vmatpush1.msra.mxu0 0.0
    %124 = vmatprep.subr.mxu0 0.0
    %125 = vmatpush1.msra.mxu0 0.0
    %126 = vmatprep.subr.mxu0 0.0
    %127 = vmatpush1.msra.mxu0 0.0
    %128 = vmatprep.subr.mxu0 0.0
    %129 = vmatpush1.msra.mxu0 0.0
    %130 = vmatprep.subr.mxu0 0.0
    %131 = vmatpush1.msra.mxu0 0.0
    %132 = vmatprep.subr.mxu0 0.0
    %133 = vmatpush1.msra.mxu0 0.0
    %134 = vmatprep.subr.mxu0 0.0
    %135 = vmatpush1.msra.mxu0 0.0
    %136 = vmatprep.subr.mxu0 0.0
    %137 = vmatpush1.msra.mxu0 0.0
    %138 = vmatprep.subr.mxu0 0.0
    %139 = vmatpush1.msra.mxu0 0.0
    %140 = vmatprep.subr.mxu0 0.0
    %141 = vmatpush1.msra.mxu0 0.0
    %142 = vmatprep.subr.mxu0 0.0
    %143 = vmatpush1.msra.mxu0 0.0
    %144 = vmatprep.subr.mxu0 0.0
    %145 = vmatpush1.msra.mxu0 0.0
    %146 = vmatprep.subr.mxu0 0.0
    %147 = vmatpush1.msra.mxu0 0.0
    %148 = vmatprep.subr.mxu0 0.0
    %149 = vmatpush1.msra.mxu0 0.0
    %150 = vmatprep.subr.mxu0 0.0
    %151 = vmatpush1.msra.mxu0 0.0
    %152 = vmatprep.subr.mxu0 0.0
    %153 = vmatpush1.msra.mxu0 0.0
    %154 = vmatprep.subr.mxu0 0.0
    %155 = vmatpush1.msra.mxu0 0.0
    %156 = vmatprep.subr.mxu0 0.0
    %157 = vmatpush1.msra.mxu0 0.0
    %158 = vmatprep.subr.mxu0 0.0
    %159 = vmatpush1.msra.mxu0 0.0
    %160 = vmatprep.subr.mxu0 0.0
    %161 = vmatpush1.msra.mxu0 0.0
    %162 = vmatprep.subr.mxu0 0.0
    %163 = vmatpush1.msra.mxu0 0.0
    %164 = vmatprep.subr.mxu0 0.0
    %165 = vmatpush1.msra.mxu0 0.0
    %166 = vmatprep.mubr.f32.mxu0 0.0
    %167 = vmatmul.mubr.f32.gmra.mrb[0].mxu0 %v97
    %v168 = vpop.f32.mrb[0].mxu0
    %v169 = vadd.f32 0.0, %v168
    %v170 = vpop.f32.mrb[0].mxu0
    %171 = vmatprep.mubr.f32.mxu0 0.0
    %172 = vmatmul.mubr.f32.gmra.mrb[0].mxu0 %v100
    %v173 = vpop.f32.mrb[0].mxu0
    %v174 = vadd.f32 0.0, %v173
    %v175 = vpop.f32.mrb[0].mxu0
    %176 = vdwg.mxu0
    %vm177 = vcmp.ge.s32.totalorder %v47, 0
    %vm178 = vmand %vm63, %vm177
    %vm179 = vmand %vm64, %vm177
    %vm180 = vcmp.lt.s32.totalorder %v47, 8
    %vm181 = vmand %vm178, %vm180
    %vm182 = vmand %vm179, %vm180
    %vm183 = vcmp.ge.s32.totalorder %v49, 8
    %vm184 = vcmp.ge.s32.totalorder %v50, 8
    %vm185 = vcmp.lt.s32.totalorder %v49, 16
    %vm186 = vcmp.lt.s32.totalorder %v50, 16
    %vm187 = vmand %vm183, %vm185
    %vm188 = vmand %vm184, %vm186
    %vm189 = vcmp.ge.s32.totalorder %v47, 8
    %vm190 = vmand %vm187, %vm189
    %vm191 = vmand %vm188, %vm189
    %vm192 = vcmp.lt.s32.totalorder %v47, 16
    %vm193 = vmand %vm190, %vm192
    %vm194 = vmand %vm191, %vm192
    %vm195 = vmor %vm181, %vm193
    %vm196 = vmor %vm182, %vm194
    %vm197 = vcmp.le.s32.totalorder %v47, %v49
    %vm198 = vcmp.le.s32.totalorder %v47, %v50
    %vm199 = vmand %vm195, %vm197
    %vm200 = vmand %vm196, %vm198
    %v201 = vsel %vm199, 0.0, -1e+30
    %v202 = vsel %vm200, 0.0, -1e+30
    %v203 = vld [vmem:[#allocation5 + $0x48] sm:$0x1]
    %v204 = vld [vmem:[#allocation5 + $0x49] sm:$0x1]
    %vm205 = vcmask 261120
    %v206 = vsel %vm205, %v169, 0.0
    %207 = vadd.xlane.f32.xlu0 %v206
    %v208 = vpop.xlane.xlu0 %207
    %v209 = vsel %vm205, %v174, 0.0
    %210 = vadd.xlane.f32.xlu0 %v209
    %v211 = vpop.xlane.xlu0 %210
    %v212 = vrcp.pop 32.0
    %v213 = vmul.f32 %v208, %v212
    %v214 = vmul.f32 %v211, %v212
    %v215 = vsub.f32 %v169, %v213
    %v216 = vsub.f32 %v174, %v214
    %v217 = vmul.f32 %v215, %v215
    %v218 = vmul.f32 %v216, %v216
    %v219 = vsel %vm205, %v217, 0.0
    %220 = vadd.xlane.f32.xlu0 %v219
    %v221 = vpop.xlane.xlu0 %220
    %v222 = vsel %vm205, %v218, 0.0
    %223 = vadd.xlane.f32.xlu0 %v222
    %v224 = vpop.xlane.xlu0 %223
    %v225 = vmul.f32 %v221, %v212
    %v226 = vmul.f32 %v224, %v212
    %v227 = vadd.f32 %v225, 1e-05
    %v228 = vadd.f32 %v226, 1e-05
    %v229 = vrsqrt.pop %v227
    %v230 = vrsqrt.pop %v228
    %v231 = vmul.f32 %v215, %v229
    %v232 = vmul.f32 %v216, %v230
    %v233 = vlaneseq
    %v234 = vshrl.u32 %v233, 7
    %v235 = vsub.s32 0, %v234
    %v236 = vrot.slane %v203, %v235
    %v237 = vmul.f32 %v231, %v236
    %v238 = vmul.f32 %v232, %v236
    %v239 = vlaneseq
    %v240 = vshrl.u32 %v239, 7
    %v241 = vsub.s32 0, %v240
    %v242 = vrot.slane %v204, %v241
    %v243 = vadd.f32 %v237, %v242
    %v244 = vadd.f32 %v238, %v242
    %v245 = vld [vmem:[#allocation2] sm:$0xf]
    %v246 = vld [vmem:[#allocation2 + $0x4] sm:$0xf]
    %v247 = vld [vmem:[#allocation2 + $0x8] sm:$0xf]
    %v248 = vld [vmem:[#allocation2 + $0xc] sm:$0xf]
    %v249 = vpack.c.bf16 %v244, %v243
    %v250 = vld [vmem:[#allocation5 + $0x4e] sm:$0x1]
    %v251 = vlaneseq
    %v252 = vshrl.u32 %v251, 7
    %v253 = vsub.s32 0, %v252
    %v254 = vrot.slane %v250, %v253
    %v259 = vunpack.c.l.b16 %v245
    %v260 = vunpack.c.l.b16 %v246
    %v261 = vunpack.c.l.b16 %v247
    %v262 = vunpack.c.l.b16 %v248
    %v263 = vpack.c.b16 %v260, %v259
    %v264 = vpack.c.b16 %v262, %v261
    %v268 = vsel %vm205, %v249, 0
    %270 = vmatprep.subr.bf16.mxu0 0
    %271 = vmatpush1.bf16.msra.mxu0 %v263
    %272 = vmatprep.subr.bf16.mxu0 0
    %273 = vmatpush1.bf16.msra.mxu0 %v264
    %274 = vmatprep.subr.bf16.mxu0 0
    %275 = vmatpush1.bf16.msra.mxu0 0
    %276 = vmatprep.subr.bf16.mxu0 0
    %277 = vmatpush1.bf16.msra.mxu0 0
    %278 = vmatprep.subr.bf16.mxu0 0
    %279 = vmatpush1.bf16.msra.mxu0 0
    %280 = vmatprep.subr.bf16.mxu0 0
    %281 = vmatpush1.bf16.msra.mxu0 0
    %282 = vmatprep.subr.bf16.mxu0 0
    %283 = vmatpush1.bf16.msra.mxu0 0
    %284 = vmatprep.subr.bf16.mxu0 0
    %285 = vmatpush1.bf16.msra.mxu0 0
    %286 = vmatprep.subr.bf16.mxu0 0
    %287 = vmatpush1.bf16.msra.mxu0 0
    %288 = vmatprep.subr.bf16.mxu0 0
    %289 = vmatpush1.bf16.msra.mxu0 0
    %290 = vmatprep.subr.bf16.mxu0 0
    %291 = vmatpush1.bf16.msra.mxu0 0
    %292 = vmatprep.subr.bf16.mxu0 0
    %293 = vmatpush1.bf16.msra.mxu0 0
    %294 = vmatprep.subr.bf16.mxu0 0
    %295 = vmatpush1.bf16.msra.mxu0 0
    %296 = vmatprep.subr.bf16.mxu0 0
    %297 = vmatpush1.bf16.msra.mxu0 0
    %298 = vmatprep.subr.bf16.mxu0 0
    %299 = vmatpush1.bf16.msra.mxu0 0
    %300 = vmatprep.subr.bf16.mxu0 0
    %301 = vmatpush1.bf16.msra.mxu0 0
    %302 = vmatprep.mubr.bf16.mxu0 0
    %303 = vmatmul.mubr.bf16.gmra.mrb[0].mxu0 %v268
    %v304 = vpop.f32.mrb[0].mxu0
    %v305 = vadd.f32 %v254, %v304
    %v306 = vpop.f32.mrb[0].mxu0
    %v307 = vpop.f32.mrb[0].mxu0
    %v308 = vadd.f32 %v254, %v307
    %v309 = vpop.f32.mrb[0].mxu0
    %310 = vdwg.mxu0
    %v311 = vld [vmem:[#allocation5 + $0x4f] sm:$0x1]
    %v312 = vlaneseq
    %v313 = vshrl.u32 %v312, 7
    %v314 = vsub.s32 0, %v313
    %v315 = vrot.slane %v311, %v314
    %v316 = vadd.f32 %v169, %v315
    %v317 = vadd.f32 %v174, %v315
    %v318 = vpack.c.bf16 %v308, %v305
    %320 = vrot.lane.b32.xlu0 %v318, 96
    %v321 = vpop.permute.xlu0 %320
    %vm322 = vcmask 64512
    %v324 = vsel %vm322, %v318, 0
    %v327 = vsel %vm322, %v321, 0
    %329 = vmatprep.subr.bf16.mxu0 0
    %330 = vmatpush1.bf16.xpose.msra.mxu0 %v327
    %331 = vmatprep.subr.bf16.mxu0 0
    %332 = vmatpush1.bf16.xpose.msra.mxu0 0
    %333 = vmatprep.subr.bf16.mxu0 0
    %334 = vmatpush1.bf16.xpose.msra.mxu0 0
    %335 = vmatprep.subr.bf16.mxu0 0
    %336 = vmatpush1.bf16.xpose.msra.mxu0 0
    %337 = vmatprep.subr.bf16.mxu0 0
    %338 = vmatpush1.bf16.xpose.msra.mxu0 0
    %339 = vmatprep.subr.bf16.mxu0 0
    %340 = vmatpush1.bf16.xpose.msra.mxu0 0
    %341 = vmatprep.subr.bf16.mxu0 0
    %342 = vmatpush1.bf16.xpose.msra.mxu0 0
    %343 = vmatprep.subr.bf16.mxu0 0
    %344 = vmatpush1.bf16.xpose.msra.mxu0 0
    %345 = vmatprep.subr.bf16.mxu0 0
    %346 = vmatpush1.bf16.xpose.msra.mxu0 0
    %347 = vmatprep.subr.bf16.mxu0 0
    %348 = vmatpush1.bf16.xpose.msra.mxu0 0
    %349 = vmatprep.subr.bf16.mxu0 0
    %350 = vmatpush1.bf16.xpose.msra.mxu0 0
    %351 = vmatprep.subr.bf16.mxu0 0
    %352 = vmatpush1.bf16.xpose.msra.mxu0 0
    %353 = vmatprep.subr.bf16.mxu0 0
    %354 = vmatpush1.bf16.xpose.msra.mxu0 0
    %355 = vmatprep.subr.bf16.mxu0 0
    %356 = vmatpush1.bf16.xpose.msra.mxu0 0
    %357 = vmatprep.subr.bf16.mxu0 0
    %358 = vmatpush1.bf16.xpose.msra.mxu0 0
    %359 = vmatprep.subr.bf16.mxu0 0
    %360 = vmatpush1.bf16.xpose.msra.mxu0 0
    %361 = vmatprep.mubr.bf16.mxu0 0
    %362 = vmatmul.mubr.bf16.gmra.mrb[0].mxu0 %v324
    %v363 = vpop.f32.mrb[0].mxu0
    %v364 = vadd.f32 0.0, %v363
    %v365 = vpop.f32.mrb[0].mxu0
    %v366 = vpop.f32.mrb[0].mxu0
    %v367 = vadd.f32 0.0, %v366
    %v368 = vpop.f32.mrb[0].mxu0
    %369 = vdwg.mxu0
    %v370 = vmul.f32 %v364, 0.35355338
    %v371 = vmul.f32 %v367, 0.35355338
    %v372 = vadd.f32 %v370, %v201
    %v373 = vadd.f32 %v371, %v202
    %vm374 = vcmask 130048
    %v375 = vsel %vm374, %v372, -inf
    %376 = vmax.xlane.f32.xlu0 %v375
    %v377 = vpop.xlane.xlu0 %376
    %v378 = vsel %vm374, %v373, -inf
    %379 = vmax.xlane.f32.xlu0 %v378
    %v380 = vpop.xlane.xlu0 %379
    %v381 = vsub.f32 %v372, %v377
    %v382 = vsub.f32 %v373, %v380
    %v383 = vmul.f32 %v381, 1.442695
    %v384 = vpow.pop %v383
    %v385 = vmul.f32 %v382, 1.442695
    %v386 = vpow.pop %v385
    %v387 = vsel %vm374, %v384, 0.0
    %388 = vadd.xlane.f32.xlu0 %v387
    %v389 = vpop.xlane.xlu0 %388
    %v390 = vsel %vm374, %v386, 0.0
    %391 = vadd.xlane.f32.xlu0 %v390
    %v392 = vpop.xlane.xlu0 %391
    %v393 = vrcp.pop %v389
    %v394 = vrcp.pop %v392
    %v395 = vmul.f32 %v384, %v393
    %v396 = vmul.f32 %v386, %v394
    %v397 = vpack.c.bf16 %v396, %v395
    %398 = vrot.lane.b32.xlu0 %v318, 64
    %v399 = vpop.permute.xlu0 %398
    %v402 = vsel %vm374, %v397, 0
    %404 = vmatprep.subr.bf16.mxu0 0
    %405 = vmatpush1.bf16.msra.mxu0 %v399
    %406 = vmatprep.subr.bf16.mxu0 0
    %407 = vmatpush1.bf16.msra.mxu0 0
    %408 = vmatprep.subr.bf16.mxu0 0
    %409 = vmatpush1.bf16.msra.mxu0 0
    %410 = vmatprep.subr.bf16.mxu0 0
    %411 = vmatpush1.bf16.msra.mxu0 0
    %412 = vmatprep.subr.bf16.mxu0 0
    %413 = vmatpush1.bf16.msra.mxu0 0
    %414 = vmatprep.subr.bf16.mxu0 0
    %415 = vmatpush1.bf16.msra.mxu0 0
    %416 = vmatprep.subr.bf16.mxu0 0
    %417 = vmatpush1.bf16.msra.mxu0 0
    %418 = vmatprep.subr.bf16.mxu0 0
    %419 = vmatpush1.bf16.msra.mxu0 0
    %420 = vmatprep.subr.bf16.mxu0 0
    %421 = vmatpush1.bf16.msra.mxu0 0
    %422 = vmatprep.subr.bf16.mxu0 0
    %423 = vmatpush1.bf16.msra.mxu0 0
    %424 = vmatprep.subr.bf16.mxu0 0
    %425 = vmatpush1.bf16.msra.mxu0 0
    %426 = vmatprep.subr.bf16.mxu0 0
    %427 = vmatpush1.bf16.msra.mxu0 0
    %428 = vmatprep.subr.bf16.mxu0 0
    %429 = vmatpush1.bf16.msra.mxu0 0
    %430 = vmatprep.subr.bf16.mxu0 0
    %431 = vmatpush1.bf16.msra.mxu0 0
    %432 = vmatprep.subr.bf16.mxu0 0
    %433 = vmatpush1.bf16.msra.mxu0 0
    %434 = vmatprep.subr.bf16.mxu0 0
    %435 = vmatpush1.bf16.msra.mxu0 0
    %436 = vmatprep.mubr.bf16.mxu0 0
    %437 = vmatmul.mubr.bf16.gmra.mrb[0].mxu0 %v402
    %v438 = vpop.f32.mrb[0].mxu0
    %v439 = vadd.f32 0.0, %v438
    %v440 = vpop.f32.mrb[0].mxu0
    %v441 = vpop.f32.mrb[0].mxu0
    %v442 = vadd.f32 0.0, %v441
    %v443 = vpop.f32.mrb[0].mxu0
    %444 = vdwg.mxu0
    %v445 = vld [vmem:[#allocation2 + $0x70] sm:$0xf]
    %v446 = vpack.c.bf16 %v442, %v439
    %v448 = vsel %vm322, %v446, 0
    %vm450 = vcmask 1043456
    %v452 = vsel %vm450, %v445, 0
    %454 = vmatprep.subr.bf16.mxu0 0
    %455 = vmatpush1.bf16.msra.mxu0 %v452
    %456 = vmatprep.subr.bf16.mxu0 0
    %457 = vmatpush1.bf16.msra.mxu0 0
    %458 = vmatprep.subr.bf16.mxu0 0
    %459 = vmatpush1.bf16.msra.mxu0 0
    %460 = vmatprep.subr.bf16.mxu0 0
    %461 = vmatpush1.bf16.msra.mxu0 0
    %462 = vmatprep.subr.bf16.mxu0 0
    %463 = vmatpush1.bf16.msra.mxu0 0
    %464 = vmatprep.subr.bf16.mxu0 0
    %465 = vmatpush1.bf16.msra.mxu0 0
    %466 = vmatprep.subr.bf16.mxu0 0
    %467 = vmatpush1.bf16.msra.mxu0 0
    %468 = vmatprep.subr.bf16.mxu0 0
    %469 = vmatpush1.bf16.msra.mxu0 0
    %470 = vmatprep.subr.bf16.mxu0 0
    %471 = vmatpush1.bf16.msra.mxu0 0
    %472 = vmatprep.subr.bf16.mxu0 0
    %473 = vmatpush1.bf16.msra.mxu0 0
    %474 = vmatprep.subr.bf16.mxu0 0
    %475 = vmatpush1.bf16.msra.mxu0 0
    %476 = vmatprep.subr.bf16.mxu0 0
    %477 = vmatpush1.bf16.msra.mxu0 0
    %478 = vmatprep.subr.bf16.mxu0 0
    %479 = vmatpush1.bf16.msra.mxu0 0
    %480 = vmatprep.subr.bf16.mxu0 0
    %481 = vmatpush1.bf16.msra.mxu0 0
    %482 = vmatprep.subr.bf16.mxu0 0
    %483 = vmatpush1.bf16.msra.mxu0 0
    %484 = vmatprep.subr.bf16.mxu0 0
    %485 = vmatpush1.bf16.msra.mxu0 0
    %486 = vmatprep.mubr.bf16.mxu0 0
    %487 = vmatmul.mubr.bf16.gmra.mrb[0].mxu0 %v448
    %v488 = vpop.f32.mrb[0].mxu0
    %v489 = vadd.f32 0.0, %v488
    %v490 = vpop.f32.mrb[0].mxu0
    %v491 = vpop.f32.mrb[0].mxu0
    %v492 = vadd.f32 0.0, %v491
    %v493 = vpop.f32.mrb[0].mxu0
    %494 = vdwg.mxu0
    %v495 = vadd.f32 %v316, %v489
    %v496 = vadd.f32 %v317, %v492
    %497 = vrot.lane.b32.xlu0 %v318, 120
    %v498 = vpop.permute.xlu0 %497
    %499 = vrot.lane.b32.xlu0 %v318, 88
    %v500 = vpop.permute.xlu0 %499
    %v502 = vsel %vm322, %v498, 0
    %v505 = vsel %vm322, %v500, 0
    %507 = vmatprep.subr.bf16.mxu0 0
    %508 = vmatpush1.bf16.xpose.msra.mxu0 %v505
    %509 = vmatprep.subr.bf16.mxu0 0
    %510 = vmatpush1.bf16.xpose.msra.mxu0 0
    %511 = vmatprep.subr.bf16.mxu0 0
    %512 = vmatpush1.bf16.xpose.msra.mxu0 0
    %513 = vmatprep.subr.bf16.mxu0 0
    %514 = vmatpush1.bf16.xpose.msra.mxu0 0
    %515 = vmatprep.subr.bf16.mxu0 0
    %516 = vmatpush1.bf16.xpose.msra.mxu0 0
    %517 = vmatprep.subr.bf16.mxu0 0
    %518 = vmatpush1.bf16.xpose.msra.mxu0 0
    %519 = vmatprep.subr.bf16.mxu0 0
    %520 = vmatpush1.bf16.xpose.msra.mxu0 0
    %521 = vmatprep.subr.bf16.mxu0 0
    %522 = vmatpush1.bf16.xpose.msra.mxu0 0
    %523 = vmatprep.subr.bf16.mxu0 0
    %524 = vmatpush1.bf16.xpose.msra.mxu0 0
    %525 = vmatprep.subr.bf16.mxu0 0
    %526 = vmatpush1.bf16.xpose.msra.mxu0 0
    %527 = vmatprep.subr.bf16.mxu0 0
    %528 = vmatpush1.bf16.xpose.msra.mxu0 0
    %529 = vmatprep.subr.bf16.mxu0 0
    %530 = vmatpush1.bf16.xpose.msra.mxu0 0
    %531 = vmatprep.subr.bf16.mxu0 0
    %532 = vmatpush1.bf16.xpose.msra.mxu0 0
    %533 = vmatprep.subr.bf16.mxu0 0
    %534 = vmatpush1.bf16.xpose.msra.mxu0 0
    %535 = vmatprep.subr.bf16.mxu0 0
    %536 = vmatpush1.bf16.xpose.msra.mxu0 0
    %537 = vmatprep.subr.bf16.mxu0 0
    %538 = vmatpush1.bf16.xpose.msra.mxu0 0
    %539 = vmatprep.mubr.bf16.mxu0 0
    %540 = vmatmul.mubr.bf16.gmra.mrb[0].mxu0 %v502
    %v541 = vpop.f32.mrb[0].mxu0
    %v542 = vadd.f32 0.0, %v541
    %v543 = vpop.f32.mrb[0].mxu0
    %v544 = vpop.f32.mrb[0].mxu0
    %v545 = vadd.f32 0.0, %v544
    %v546 = vpop.f32.mrb[0].mxu0
    %547 = vdwg.mxu0
    %v548 = vmul.f32 %v542, 0.35355338
    %v549 = vmul.f32 %v545, 0.35355338
    %v550 = vadd.f32 %v548, %v201
    %v551 = vadd.f32 %v549, %v202
    %v552 = vsel %vm374, %v550, -inf
    %553 = vmax.xlane.f32.xlu0 %v552
    %v554 = vpop.xlane.xlu0 %553
    %v555 = vsel %vm374, %v551, -inf
    %556 = vmax.xlane.f32.xlu0 %v555
    %v557 = vpop.xlane.xlu0 %556
    %v558 = vsub.f32 %v550, %v554
    %v559 = vsub.f32 %v551, %v557
    %v560 = vmul.f32 %v558, 1.442695
    %v561 = vpow.pop %v560
    %v562 = vmul.f32 %v559, 1.442695
    %v563 = vpow.pop %v562
    %v564 = vsel %vm374, %v561, 0.0
    %565 = vadd.xlane.f32.xlu0 %v564
    %v566 = vpop.xlane.xlu0 %565
    %v567 = vsel %vm374, %v563, 0.0
    %568 = vadd.xlane.f32.xlu0 %v567
    %v569 = vpop.xlane.xlu0 %568
    %v570 = vrcp.pop %v566
    %v571 = vrcp.pop %v569
    %v572 = vmul.f32 %v561, %v570
    %v573 = vmul.f32 %v563, %v571
    %v574 = vpack.c.bf16 %v573, %v572
    %575 = vrot.lane.b32.xlu0 %v318, 56
    %v576 = vpop.permute.xlu0 %575
    %v579 = vsel %vm374, %v574, 0
    %581 = vmatprep.subr.bf16.mxu0 0
    %582 = vmatpush1.bf16.msra.mxu0 %v576
    %583 = vmatprep.subr.bf16.mxu0 0
    %584 = vmatpush1.bf16.msra.mxu0 0
    %585 = vmatprep.subr.bf16.mxu0 0
    %586 = vmatpush1.bf16.msra.mxu0 0
    %587 = vmatprep.subr.bf16.mxu0 0
    %588 = vmatpush1.bf16.msra.mxu0 0
    %589 = vmatprep.subr.bf16.mxu0 0
    %590 = vmatpush1.bf16.msra.mxu0 0
    %591 = vmatprep.subr.bf16.mxu0 0
    %592 = vmatpush1.bf16.msra.mxu0 0
    %593 = vmatprep.subr.bf16.mxu0 0
    %594 = vmatpush1.bf16.msra.mxu0 0
    %595 = vmatprep.subr.bf16.mxu0 0
    %596 = vmatpush1.bf16.msra.mxu0 0
    %597 = vmatprep.subr.bf16.mxu0 0
    %598 = vmatpush1.bf16.msra.mxu0 0
    %599 = vmatprep.subr.bf16.mxu0 0
    %600 = vmatpush1.bf16.msra.mxu0 0
    %601 = vmatprep.subr.bf16.mxu0 0
    %602 = vmatpush1.bf16.msra.mxu0 0
    %603 = vmatprep.subr.bf16.mxu0 0
    %604 = vmatpush1.bf16.msra.mxu0 0
    %605 = vmatprep.subr.bf16.mxu0 0
    %606 = vmatpush1.bf16.msra.mxu0 0
    %607 = vmatprep.subr.bf16.mxu0 0
    %608 = vmatpush1.bf16.msra.mxu0 0
    %609 = vmatprep.subr.bf16.mxu0 0
    %610 = vmatpush1.bf16.msra.mxu0 0
    %611 = vmatprep.subr.bf16.mxu0 0
    %612 = vmatpush1.bf16.msra.mxu0 0
    %613 = vmatprep.mubr.bf16.mxu0 0
    %614 = vmatmul.mubr.bf16.gmra.mrb[0].mxu0 %v579
    %v615 = vpop.f32.mrb[0].mxu0
    %v616 = vadd.f32 0.0, %v615
    %v617 = vpop.f32.mrb[0].mxu0
    %v618 = vpop.f32.mrb[0].mxu0
    %v619 = vadd.f32 0.0, %v618
    %v620 = vpop.f32.mrb[0].mxu0
    %621 = vdwg.mxu0
    %v622 = vld [vmem:[#allocation2 + $0x74] sm:$0xf]
    %v623 = vpack.c.bf16 %v619, %v616
    %v625 = vsel %vm322, %v623, 0
    %v628 = vsel %vm450, %v622, 0
    %630 = vmatprep.subr.bf16.mxu0 0
    %631 = vmatpush1.bf16.msra.mxu0 %v628
    %632 = vmatprep.subr.bf16.mxu0 0
    %633 = vmatpush1.bf16.msra.mxu0 0
    %634 = vmatprep.subr.bf16.mxu0 0
    %635 = vmatpush1.bf16.msra.mxu0 0
    %636 = vmatprep.subr.bf16.mxu0 0
    %637 = vmatpush1.bf16.msra.mxu0 0
    %638 = vmatprep.subr.bf16.mxu0 0
    %639 = vmatpush1.bf16.msra.mxu0 0
    %640 = vmatprep.subr.bf16.mxu0 0
    %641 = vmatpush1.bf16.msra.mxu0 0
    %642 = vmatprep.subr.bf16.mxu0 0
    %643 = vmatpush1.bf16.msra.mxu0 0
    %644 = vmatprep.subr.bf16.mxu0 0
    %645 = vmatpush1.bf16.msra.mxu0 0
    %646 = vmatprep.subr.bf16.mxu0 0
    %647 = vmatpush1.bf16.msra.mxu0 0
    %648 = vmatprep.subr.bf16.mxu0 0
    %649 = vmatpush1.bf16.msra.mxu0 0
    %650 = vmatprep.subr.bf16.mxu0 0
    %651 = vmatpush1.bf16.msra.mxu0 0
    %652 = vmatprep.subr.bf16.mxu0 0
    %653 = vmatpush1.bf16.msra.mxu0 0
    %654 = vmatprep.subr.bf16.mxu0 0
    %655 = vmatpush1.bf16.msra.mxu0 0
    %656 = vmatprep.subr.bf16.mxu0 0
    %657 = vmatpush1.bf16.msra.mxu0 0
    %658 = vmatprep.subr.bf16.mxu0 0
    %659 = vmatpush1.bf16.msra.mxu0 0
    %660 = vmatprep.subr.bf16.mxu0 0
    %661 = vmatpush1.bf16.msra.mxu0 0
    %662 = vmatprep.mubr.bf16.mxu0 0
    %663 = vmatmul.mubr.bf16.gmra.mrb[0].mxu0 %v625
    %v664 = vpop.f32.mrb[0].mxu0
    %v665 = vadd.f32 0.0, %v664
    %v666 = vpop.f32.mrb[0].mxu0
    %v667 = vpop.f32.mrb[0].mxu0
    %v668 = vadd.f32 0.0, %v667
    %v669 = vpop.f32.mrb[0].mxu0
    %670 = vdwg.mxu0
    %v671 = vadd.f32 %v495, %v665
    %v672 = vadd.f32 %v496, %v668
    %673 = vrot.lane.b32.xlu0 %v318, 112
    %v674 = vpop.permute.xlu0 %673
    %675 = vrot.lane.b32.xlu0 %v318, 80
    %v676 = vpop.permute.xlu0 %675
    %v678 = vsel %vm322, %v674, 0
    %v681 = vsel %vm322, %v676, 0
    %683 = vmatprep.subr.bf16.mxu0 0
    %684 = vmatpush1.bf16.xpose.msra.mxu0 %v681
    %685 = vmatprep.subr.bf16.mxu0 0
    %686 = vmatpush1.bf16.xpose.msra.mxu0 0
    %687 = vmatprep.subr.bf16.mxu0 0
    %688 = vmatpush1.bf16.xpose.msra.mxu0 0
    %689 = vmatprep.subr.bf16.mxu0 0
    %690 = vmatpush1.bf16.xpose.msra.mxu0 0
    %691 = vmatprep.subr.bf16.mxu0 0
    %692 = vmatpush1.bf16.xpose.msra.mxu0 0
    %693 = vmatprep.subr.bf16.mxu0 0
    %694 = vmatpush1.bf16.xpose.msra.mxu0 0
    %695 = vmatprep.subr.bf16.mxu0 0
    %696 = vmatpush1.bf16.xpose.msra.mxu0 0
    %697 = vmatprep.subr.bf16.mxu0 0
    %698 = vmatpush1.bf16.xpose.msra.mxu0 0
    %699 = vmatprep.subr.bf16.mxu0 0
    %700 = vmatpush1.bf16.xpose.msra.mxu0 0
    %701 = vmatprep.subr.bf16.mxu0 0
    %702 = vmatpush1.bf16.xpose.msra.mxu0 0
    %703 = vmatprep.subr.bf16.mxu0 0
    %704 = vmatpush1.bf16.xpose.msra.mxu0 0
    %705 = vmatprep.subr.bf16.mxu0 0
    %706 = vmatpush1.bf16.xpose.msra.mxu0 0
    %707 = vmatprep.subr.bf16.mxu0 0
    %708 = vmatpush1.bf16.xpose.msra.mxu0 0
    %709 = vmatprep.subr.bf16.mxu0 0
    %710 = vmatpush1.bf16.xpose.msra.mxu0 0
    %711 = vmatprep.subr.bf16.mxu0 0
    %712 = vmatpush1.bf16.xpose.msra.mxu0 0
    %713 = vmatprep.subr.bf16.mxu0 0
    %714 = vmatpush1.bf16.xpose.msra.mxu0 0
    %715 = vmatprep.mubr.bf16.mxu0 0
    %716 = vmatmul.mubr.bf16.gmra.mrb[0].mxu0 %v678
    %v717 = vpop.f32.mrb[0].mxu0
    %v718 = vadd.f32 0.0, %v717
    %v719 = vpop.f32.mrb[0].mxu0
    %v720 = vpop.f32.mrb[0].mxu0
    %v721 = vadd.f32 0.0, %v720
    %v722 = vpop.f32.mrb[0].mxu0
    %723 = vdwg.mxu0
    %v724 = vmul.f32 %v718, 0.35355338
    %v725 = vmul.f32 %v721, 0.35355338
    %v726 = vadd.f32 %v724, %v201
    %v727 = vadd.f32 %v725, %v202
    %v728 = vsel %vm374, %v726, -inf
    %729 = vmax.xlane.f32.xlu0 %v728
    %v730 = vpop.xlane.xlu0 %729
    %v731 = vsel %vm374, %v727, -inf
    %732 = vmax.xlane.f32.xlu0 %v731
    %v733 = vpop.xlane.xlu0 %732
    %v734 = vsub.f32 %v726, %v730
    %v735 = vsub.f32 %v727, %v733
    %v736 = vmul.f32 %v734, 1.442695
    %v737 = vpow.pop %v736
    %v738 = vmul.f32 %v735, 1.442695
    %v739 = vpow.pop %v738
    %v740 = vsel %vm374, %v737, 0.0
    %741 = vadd.xlane.f32.xlu0 %v740
    %v742 = vpop.xlane.xlu0 %741
    %v743 = vsel %vm374, %v739, 0.0
    %744 = vadd.xlane.f32.xlu0 %v743
    %v745 = vpop.xlane.xlu0 %744
    %v746 = vrcp.pop %v742
    %v747 = vrcp.pop %v745
    %v748 = vmul.f32 %v737, %v746
    %v749 = vmul.f32 %v739, %v747
    %v750 = vpack.c.bf16 %v749, %v748
    %751 = vrot.lane.b32.xlu0 %v318, 48
    %v752 = vpop.permute.xlu0 %751
    %v755 = vsel %vm374, %v750, 0
    %757 = vmatprep.subr.bf16.mxu0 0
    %758 = vmatpush1.bf16.msra.mxu0 %v752
    %759 = vmatprep.subr.bf16.mxu0 0
    %760 = vmatpush1.bf16.msra.mxu0 0
    %761 = vmatprep.subr.bf16.mxu0 0
    %762 = vmatpush1.bf16.msra.mxu0 0
    %763 = vmatprep.subr.bf16.mxu0 0
    %764 = vmatpush1.bf16.msra.mxu0 0
    %765 = vmatprep.subr.bf16.mxu0 0
    %766 = vmatpush1.bf16.msra.mxu0 0
    %767 = vmatprep.subr.bf16.mxu0 0
    %768 = vmatpush1.bf16.msra.mxu0 0
    %769 = vmatprep.subr.bf16.mxu0 0
    %770 = vmatpush1.bf16.msra.mxu0 0
    %771 = vmatprep.subr.bf16.mxu0 0
    %772 = vmatpush1.bf16.msra.mxu0 0
    %773 = vmatprep.subr.bf16.mxu0 0
    %774 = vmatpush1.bf16.msra.mxu0 0
    %775 = vmatprep.subr.bf16.mxu0 0
    %776 = vmatpush1.bf16.msra.mxu0 0
    %777 = vmatprep.subr.bf16.mxu0 0
    %778 = vmatpush1.bf16.msra.mxu0 0
    %779 = vmatprep.subr.bf16.mxu0 0
    %780 = vmatpush1.bf16.msra.mxu0 0
    %781 = vmatprep.subr.bf16.mxu0 0
    %782 = vmatpush1.bf16.msra.mxu0 0
    %783 = vmatprep.subr.bf16.mxu0 0
    %784 = vmatpush1.bf16.msra.mxu0 0
    %785 = vmatprep.subr.bf16.mxu0 0
    %786 = vmatpush1.bf16.msra.mxu0 0
    %787 = vmatprep.subr.bf16.mxu0 0
    %788 = vmatpush1.bf16.msra.mxu0 0
    %789 = vmatprep.mubr.bf16.mxu0 0
    %790 = vmatmul.mubr.bf16.gmra.mrb[0].mxu0 %v755
    %v791 = vpop.f32.mrb[0].mxu0
    %v792 = vadd.f32 0.0, %v791
    %v793 = vpop.f32.mrb[0].mxu0
    %v794 = vpop.f32.mrb[0].mxu0
    %v795 = vadd.f32 0.0, %v794
    %v796 = vpop.f32.mrb[0].mxu0
    %797 = vdwg.mxu0
    %v798 = vld [vmem:[#allocation2 + $0x78] sm:$0xf]
    %v799 = vpack.c.bf16 %v795, %v792
    %v801 = vsel %vm322, %v799, 0
    %v804 = vsel %vm450, %v798, 0
    %806 = vmatprep.subr.bf16.mxu0 0
    %807 = vmatpush1.bf16.msra.mxu0 %v804
    %808 = vmatprep.subr.bf16.mxu0 0
    %809 = vmatpush1.bf16.msra.mxu0 0
    %810 = vmatprep.subr.bf16.mxu0 0
    %811 = vmatpush1.bf16.msra.mxu0 0
    %812 = vmatprep.subr.bf16.mxu0 0
    %813 = vmatpush1.bf16.msra.mxu0 0
    %814 = vmatprep.subr.bf16.mxu0 0
    %815 = vmatpush1.bf16.msra.mxu0 0
    %816 = vmatprep.subr.bf16.mxu0 0
    %817 = vmatpush1.bf16.msra.mxu0 0
    %818 = vmatprep.subr.bf16.mxu0 0
    %819 = vmatpush1.bf16.msra.mxu0 0
    %820 = vmatprep.subr.bf16.mxu0 0
    %821 = vmatpush1.bf16.msra.mxu0 0
    %822 = vmatprep.subr.bf16.mxu0 0
    %823 = vmatpush1.bf16.msra.mxu0 0
    %824 = vmatprep.subr.bf16.mxu0 0
    %825 = vmatpush1.bf16.msra.mxu0 0
    %826 = vmatprep.subr.bf16.mxu0 0
    %827 = vmatpush1.bf16.msra.mxu0 0
    %828 = vmatprep.subr.bf16.mxu0 0
    %829 = vmatpush1.bf16.msra.mxu0 0
    %830 = vmatprep.subr.bf16.mxu0 0
    %831 = vmatpush1.bf16.msra.mxu0 0
    %832 = vmatprep.subr.bf16.mxu0 0
    %833 = vmatpush1.bf16.msra.mxu0 0
    %834 = vmatprep.subr.bf16.mxu0 0
    %835 = vmatpush1.bf16.msra.mxu0 0
    %836 = vmatprep.subr.bf16.mxu0 0
    %837 = vmatpush1.bf16.msra.mxu0 0
    %838 = vmatprep.mubr.bf16.mxu0 0
    %839 = vmatmul.mubr.bf16.gmra.mrb[0].mxu0 %v801
    %v840 = vpop.f32.mrb[0].mxu0
    %v841 = vadd.f32 0.0, %v840
    %v842 = vpop.f32.mrb[0].mxu0
    %v843 = vpop.f32.mrb[0].mxu0
    %v844 = vadd.f32 0.0, %v843
    %v845 = vpop.f32.mrb[0].mxu0
    %846 = vdwg.mxu0
    %v847 = vadd.f32 %v671, %v841
    %v848 = vadd.f32 %v672, %v844
    %849 = vrot.lane.b32.xlu0 %v318, 104
    %v850 = vpop.permute.xlu0 %849
    %851 = vrot.lane.b32.xlu0 %v318, 72
    %v852 = vpop.permute.xlu0 %851
    %v854 = vsel %vm322, %v850, 0
    %v857 = vsel %vm322, %v852, 0
    %859 = vmatprep.subr.bf16.mxu0 0
    %860 = vmatpush1.bf16.xpose.msra.mxu0 %v857
    %861 = vmatprep.subr.bf16.mxu0 0
    %862 = vmatpush1.bf16.xpose.msra.mxu0 0
    %863 = vmatprep.subr.bf16.mxu0 0
    %864 = vmatpush1.bf16.xpose.msra.mxu0 0
    %865 = vmatprep.subr.bf16.mxu0 0
    %866 = vmatpush1.bf16.xpose.msra.mxu0 0
    %867 = vmatprep.subr.bf16.mxu0 0
    %868 = vmatpush1.bf16.xpose.msra.mxu0 0
    %869 = vmatprep.subr.bf16.mxu0 0
    %870 = vmatpush1.bf16.xpose.msra.mxu0 0
    %871 = vmatprep.subr.bf16.mxu0 0
    %872 = vmatpush1.bf16.xpose.msra.mxu0 0
    %873 = vmatprep.subr.bf16.mxu0 0
    %874 = vmatpush1.bf16.xpose.msra.mxu0 0
    %875 = vmatprep.subr.bf16.mxu0 0
    %876 = vmatpush1.bf16.xpose.msra.mxu0 0
    %877 = vmatprep.subr.bf16.mxu0 0
    %878 = vmatpush1.bf16.xpose.msra.mxu0 0
    %879 = vmatprep.subr.bf16.mxu0 0
    %880 = vmatpush1.bf16.xpose.msra.mxu0 0
    %881 = vmatprep.subr.bf16.mxu0 0
    %882 = vmatpush1.bf16.xpose.msra.mxu0 0
    %883 = vmatprep.subr.bf16.mxu0 0
    %884 = vmatpush1.bf16.xpose.msra.mxu0 0
    %885 = vmatprep.subr.bf16.mxu0 0
    %886 = vmatpush1.bf16.xpose.msra.mxu0 0
    %887 = vmatprep.subr.bf16.mxu0 0
    %888 = vmatpush1.bf16.xpose.msra.mxu0 0
    %889 = vmatprep.subr.bf16.mxu0 0
    %890 = vmatpush1.bf16.xpose.msra.mxu0 0
    %891 = vmatprep.mubr.bf16.mxu0 0
    %892 = vmatmul.mubr.bf16.gmra.mrb[0].mxu0 %v854
    %v893 = vpop.f32.mrb[0].mxu0
    %v894 = vadd.f32 0.0, %v893
    %v895 = vpop.f32.mrb[0].mxu0
    %v896 = vpop.f32.mrb[0].mxu0
    %v897 = vadd.f32 0.0, %v896
    %v898 = vpop.f32.mrb[0].mxu0
    %899 = vdwg.mxu0
    %v900 = vmul.f32 %v894, 0.35355338
    %v901 = vmul.f32 %v897, 0.35355338
    %v902 = vadd.f32 %v900, %v201
    %v903 = vadd.f32 %v901, %v202
    %v904 = vsel %vm374, %v902, -inf
    %905 = vmax.xlane.f32.xlu0 %v904
    %v906 = vpop.xlane.xlu0 %905
    %v907 = vsel %vm374, %v903, -inf
    %908 = vmax.xlane.f32.xlu0 %v907
    %v909 = vpop.xlane.xlu0 %908
    %v910 = vsub.f32 %v902, %v906
    %v911 = vsub.f32 %v903, %v909
    %v912 = vmul.f32 %v910, 1.442695
    %v913 = vpow.pop %v912
    %v914 = vmul.f32 %v911, 1.442695
    %v915 = vpow.pop %v914
    %v916 = vsel %vm374, %v913, 0.0
    %917 = vadd.xlane.f32.xlu0 %v916
    %v918 = vpop.xlane.xlu0 %917
    %v919 = vsel %vm374, %v915, 0.0
    %920 = vadd.xlane.f32.xlu0 %v919
    %v921 = vpop.xlane.xlu0 %920
    %v922 = vrcp.pop %v918
    %v923 = vrcp.pop %v921
    %v924 = vmul.f32 %v913, %v922
    %v925 = vmul.f32 %v915, %v923
    %v926 = vpack.c.bf16 %v925, %v924
    %927 = vrot.lane.b32.xlu0 %v318, 40
    %v928 = vpop.permute.xlu0 %927
    %v931 = vsel %vm374, %v926, 0
    %933 = vmatprep.subr.bf16.mxu0 0
    %934 = vmatpush1.bf16.msra.mxu0 %v928
    %935 = vmatprep.subr.bf16.mxu0 0
    %936 = vmatpush1.bf16.msra.mxu0 0
    %937 = vmatprep.subr.bf16.mxu0 0
    %938 = vmatpush1.bf16.msra.mxu0 0
    %939 = vmatprep.subr.bf16.mxu0 0
    %940 = vmatpush1.bf16.msra.mxu0 0
    %941 = vmatprep.subr.bf16.mxu0 0
    %942 = vmatpush1.bf16.msra.mxu0 0
    %943 = vmatprep.subr.bf16.mxu0 0
    %944 = vmatpush1.bf16.msra.mxu0 0
    %945 = vmatprep.subr.bf16.mxu0 0
    %946 = vmatpush1.bf16.msra.mxu0 0
    %947 = vmatprep.subr.bf16.mxu0 0
    %948 = vmatpush1.bf16.msra.mxu0 0
    %949 = vmatprep.subr.bf16.mxu0 0
    %950 = vmatpush1.bf16.msra.mxu0 0
    %951 = vmatprep.subr.bf16.mxu0 0
    %952 = vmatpush1.bf16.msra.mxu0 0
    %953 = vmatprep.subr.bf16.mxu0 0
    %954 = vmatpush1.bf16.msra.mxu0 0
    %955 = vmatprep.subr.bf16.mxu0 0
    %956 = vmatpush1.bf16.msra.mxu0 0
    %957 = vmatprep.subr.bf16.mxu0 0
    %958 = vmatpush1.bf16.msra.mxu0 0
    %959 = vmatprep.subr.bf16.mxu0 0
    %960 = vmatpush1.bf16.msra.mxu0 0
    %961 = vmatprep.subr.bf16.mxu0 0
    %962 = vmatpush1.bf16.msra.mxu0 0
    %963 = vmatprep.subr.bf16.mxu0 0
    %964 = vmatpush1.bf16.msra.mxu0 0
    %965 = vmatprep.mubr.bf16.mxu0 0
    %966 = vmatmul.mubr.bf16.gmra.mrb[0].mxu0 %v931
    %v967 = vpop.f32.mrb[0].mxu0
    %v968 = vadd.f32 0.0, %v967
    %v969 = vpop.f32.mrb[0].mxu0
    %v970 = vpop.f32.mrb[0].mxu0
    %v971 = vadd.f32 0.0, %v970
    %v972 = vpop.f32.mrb[0].mxu0
    %973 = vdwg.mxu0
    %v974 = vld [vmem:[#allocation2 + $0x7c] sm:$0xf]
    %v975 = vpack.c.bf16 %v971, %v968
    %v977 = vsel %vm322, %v975, 0
    %v980 = vsel %vm450, %v974, 0
    %982 = vmatprep.subr.bf16.mxu0 0
    %983 = vmatpush1.bf16.msra.mxu0 %v980
    %984 = vmatprep.subr.bf16.mxu0 0
    %985 = vmatpush1.bf16.msra.mxu0 0
    %986 = vmatprep.subr.bf16.mxu0 0
    %987 = vmatpush1.bf16.msra.mxu0 0
    %988 = vmatprep.subr.bf16.mxu0 0
    %989 = vmatpush1.bf16.msra.mxu0 0
    %990 = vmatprep.subr.bf16.mxu0 0
    %991 = vmatpush1.bf16.msra.mxu0 0
    %992 = vmatprep.subr.bf16.mxu0 0
    %993 = vmatpush1.bf16.msra.mxu0 0
    %994 = vmatprep.subr.bf16.mxu0 0
    %995 = vmatpush1.bf16.msra.mxu0 0
    %996 = vmatprep.subr.bf16.mxu0 0
    %997 = vmatpush1.bf16.msra.mxu0 0
    %998 = vmatprep.subr.bf16.mxu0 0
    %999 = vmatpush1.bf16.msra.mxu0 0
    %1000 = vmatprep.subr.bf16.mxu0 0
    %1001 = vmatpush1.bf16.msra.mxu0 0
    %1002 = vmatprep.subr.bf16.mxu0 0
    %1003 = vmatpush1.bf16.msra.mxu0 0
    %1004 = vmatprep.subr.bf16.mxu0 0
    %1005 = vmatpush1.bf16.msra.mxu0 0
    %1006 = vmatprep.subr.bf16.mxu0 0
    %1007 = vmatpush1.bf16.msra.mxu0 0
    %1008 = vmatprep.subr.bf16.mxu0 0
    %1009 = vmatpush1.bf16.msra.mxu0 0
    %1010 = vmatprep.subr.bf16.mxu0 0
    %1011 = vmatpush1.bf16.msra.mxu0 0
    %1012 = vmatprep.subr.bf16.mxu0 0
    %1013 = vmatpush1.bf16.msra.mxu0 0
    %1014 = vmatprep.mubr.bf16.mxu0 0
    %1015 = vmatmul.mubr.bf16.gmra.mrb[0].mxu0 %v977
    %v1016 = vpop.f32.mrb[0].mxu0
    %v1017 = vadd.f32 0.0, %v1016
    %v1018 = vpop.f32.mrb[0].mxu0
    %v1019 = vpop.f32.mrb[0].mxu0
    %v1020 = vadd.f32 0.0, %v1019
    %v1021 = vpop.f32.mrb[0].mxu0
    %1022 = vdwg.mxu0
    %v1023 = vadd.f32 %v847, %v1017
    %v1024 = vadd.f32 %v848, %v1020
    %v1025 = vld [vmem:[#allocation5 + $0x4a] sm:$0x1]
    %v1026 = vld [vmem:[#allocation5 + $0x4b] sm:$0x1]
    %v1027 = vsel %vm205, %v1023, 0.0
    %1028 = vadd.xlane.f32.xlu0 %v1027
    %v1029 = vpop.xlane.xlu0 %1028
    %v1030 = vsel %vm205, %v1024, 0.0
    %1031 = vadd.xlane.f32.xlu0 %v1030
    %v1032 = vpop.xlane.xlu0 %1031
    %v1033 = vmul.f32 %v1029, %v212
    %v1034 = vmul.f32 %v1032, %v212
    %v1035 = vsub.f32 %v1023, %v1033
    %v1036 = vsub.f32 %v1024, %v1034
    %v1037 = vmul.f32 %v1035, %v1035
    %v1038 = vmul.f32 %v1036, %v1036
    %v1039 = vsel %vm205, %v1037, 0.0
    %1040 = vadd.xlane.f32.xlu0 %v1039
    %v1041 = vpop.xlane.xlu0 %1040
    %v1042 = vsel %vm205, %v1038, 0.0
    %1043 = vadd.xlane.f32.xlu0 %v1042
    %v1044 = vpop.xlane.xlu0 %1043
    %v1045 = vmul.f32 %v1041, %v212
    %v1046 = vmul.f32 %v1044, %v212
    %v1047 = vadd.f32 %v1045, 1e-05
    %v1048 = vadd.f32 %v1046, 1e-05
    %v1049 = vrsqrt.pop %v1047
    %v1050 = vrsqrt.pop %v1048
    %v1051 = vmul.f32 %v1035, %v1049
    %v1052 = vmul.f32 %v1036, %v1050
    %v1053 = vlaneseq
    %v1054 = vshrl.u32 %v1053, 7
    %v1055 = vsub.s32 0, %v1054
    %v1056 = vrot.slane %v1025, %v1055
    %v1057 = vmul.f32 %v1051, %v1056
    %v1058 = vmul.f32 %v1052, %v1056
    %v1059 = vlaneseq
    %v1060 = vshrl.u32 %v1059, 7
    %v1061 = vsub.s32 0, %v1060
    %v1062 = vrot.slane %v1026, %v1061
    %v1063 = vadd.f32 %v1057, %v1062
    %v1064 = vadd.f32 %v1058, %v1062
    %v1065 = vld [vmem:[#allocation2 + $0x10] sm:$0xf]
    %v1066 = vld [vmem:[#allocation2 + $0x14] sm:$0xf]
    %v1067 = vld [vmem:[#allocation2 + $0x18] sm:$0xf]
    %v1068 = vld [vmem:[#allocation2 + $0x1c] sm:$0xf]
    %v1069 = vpack.c.bf16 %v1064, %v1063
    %v1070 = vld [vmem:[#allocation5 + $0x50] sm:$0x1]
    %v1071 = vlaneseq
    %v1072 = vshrl.u32 %v1071, 7
    %v1073 = vsub.s32 0, %v1072
    %v1074 = vrot.slane %v1070, %v1073
    %v1079 = vunpack.c.l.b16 %v1065
    %v1080 = vunpack.c.l.b16 %v1066
    %v1081 = vunpack.c.l.b16 %v1067
    %v1082 = vunpack.c.l.b16 %v1068
    %v1083 = vpack.c.b16 %v1080, %v1079
    %v1084 = vpack.c.b16 %v1082, %v1081
    %v1088 = vsel %vm205, %v1069, 0
    %1090 = vmatprep.subr.bf16.mxu0 0
    %1091 = vmatpush1.bf16.msra.mxu0 %v1083
    %1092 = vmatprep.subr.bf16.mxu0 0
    %1093 = vmatpush1.bf16.msra.mxu0 %v1084
    %1094 = vmatprep.subr.bf16.mxu0 0
    %1095 = vmatpush1.bf16.msra.mxu0 0
    %1096 = vmatprep.subr.bf16.mxu0 0
    %1097 = vmatpush1.bf16.msra.mxu0 0
    %1098 = vmatprep.subr.bf16.mxu0 0
    %1099 = vmatpush1.bf16.msra.mxu0 0
    %1100 = vmatprep.subr.bf16.mxu0 0
    %1101 = vmatpush1.bf16.msra.mxu0 0
    %1102 = vmatprep.subr.bf16.mxu0 0
    %1103 = vmatpush1.bf16.msra.mxu0 0
    %1104 = vmatprep.subr.bf16.mxu0 0
    %1105 = vmatpush1.bf16.msra.mxu0 0
    %1106 = vmatprep.subr.bf16.mxu0 0
    %1107 = vmatpush1.bf16.msra.mxu0 0
    %1108 = vmatprep.subr.bf16.mxu0 0
    %1109 = vmatpush1.bf16.msra.mxu0 0
    %1110 = vmatprep.subr.bf16.mxu0 0
    %1111 = vmatpush1.bf16.msra.mxu0 0
    %1112 = vmatprep.subr.bf16.mxu0 0
    %1113 = vmatpush1.bf16.msra.mxu0 0
    %1114 = vmatprep.subr.bf16.mxu0 0
    %1115 = vmatpush1.bf16.msra.mxu0 0
    %1116 = vmatprep.subr.bf16.mxu0 0
    %1117 = vmatpush1.bf16.msra.mxu0 0
    %1118 = vmatprep.subr.bf16.mxu0 0
    %1119 = vmatpush1.bf16.msra.mxu0 0
    %1120 = vmatprep.subr.bf16.mxu0 0
    %1121 = vmatpush1.bf16.msra.mxu0 0
    %1122 = vmatprep.mubr.bf16.mxu0 0
    %1123 = vmatmul.mubr.bf16.gmra.mrb[0].mxu0 %v1088
    %v1124 = vpop.f32.mrb[0].mxu0
    %v1125 = vadd.f32 %v1074, %v1124
    %v1126 = vpop.f32.mrb[0].mxu0
    %v1127 = vpop.f32.mrb[0].mxu0
    %v1128 = vadd.f32 %v1074, %v1127
    %v1129 = vpop.f32.mrb[0].mxu0
    %1130 = vdwg.mxu0
    %v1131 = vmul.f32 %v1125, 0.5
    %v1132 = vmul.f32 %v1128, 0.5
    %v1133 = vmul.f32 %v1125, 0.70710677
    %v1134 = vmul.f32 %v1128, 0.70710677
    %vm1135 = vcmp.ge.f32.partialorder %v1133, 0.0
    %vm1136 = vcmp.ge.f32.partialorder %v1134, 0.0
    %v1137 = vsel %vm1135, 1.0, -1.0
    %v1138 = vsel %vm1136, 1.0, -1.0
    %v1139 = vand.u32 2147483647, %v1133
    %v1140 = vand.u32 2147483647, %v1134
    %v1141 = vmul.f32 %v1139, 0.3275911
    %v1142 = vmul.f32 %v1140, 0.3275911
    %v1143 = vadd.f32 %v1141, 1.0
    %v1144 = vadd.f32 %v1142, 1.0
    %v1145 = vrcp.pop %v1143
    %v1146 = vmul.f32 1.0, %v1145
    %v1147 = vrcp.pop %v1144
    %v1148 = vmul.f32 1.0, %v1147
    %v1149 = vmul.f32 %v1146, 1.0614054
    %v1150 = vmul.f32 %v1148, 1.0614054
    %v1151 = vadd.f32 %v1149, -1.4531521
    %v1152 = vadd.f32 %v1150, -1.4531521
    %v1153 = vmul.f32 %v1151, %v1146
    %v1154 = vmul.f32 %v1152, %v1148
    %v1155 = vadd.f32 %v1153, 1.4214138
    %v1156 = vadd.f32 %v1154, 1.4214138
    %v1157 = vmul.f32 %v1155, %v1146
    %v1158 = vmul.f32 %v1156, %v1148
    %v1159 = vadd.f32 %v1157, -0.28449672
    %v1160 = vadd.f32 %v1158, -0.28449672
    %v1161 = vmul.f32 %v1159, %v1146
    %v1162 = vmul.f32 %v1160, %v1148
    %v1163 = vadd.f32 %v1161, 0.2548296
    %v1164 = vadd.f32 %v1162, 0.2548296
    %v1165 = vmul.f32 %v1163, %v1146
    %v1166 = vmul.f32 %v1164, %v1148
    %v1167 = vsub.f32 0.0, %v1139
    %v1168 = vsub.f32 0.0, %v1140
    %v1169 = vmul.f32 %v1167, %v1139
    %v1170 = vmul.f32 %v1168, %v1140
    %v1171 = vmul.f32 %v1169, 1.442695
    %v1172 = vpow.pop %v1171
    %v1173 = vmul.f32 %v1170, 1.442695
    %v1174 = vpow.pop %v1173
    %v1175 = vmul.f32 %v1165, %v1172
    %v1176 = vmul.f32 %v1166, %v1174
    %v1177 = vsub.f32 1.0, %v1175
    %v1178 = vsub.f32 1.0, %v1176
    %v1179 = vmul.f32 %v1137, %v1177
    %v1180 = vmul.f32 %v1138, %v1178
    %v1181 = vadd.f32 %v1179, 1.0
    %v1182 = vadd.f32 %v1180, 1.0
    %v1183 = vmul.f32 %v1131, %v1181
    %v1184 = vmul.f32 %v1132, %v1182
    %v1185 = vld [vmem:[#allocation2 + $0x20] sm:$0xf]
    %v1186 = vld [vmem:[#allocation2 + $0x24] sm:$0xf]
    %v1187 = vld [vmem:[#allocation2 + $0x28] sm:$0xf]
    %v1188 = vld [vmem:[#allocation2 + $0x2c] sm:$0xf]
    %v1189 = vld [vmem:[#allocation2 + $0x30] sm:$0xf]
    %v1190 = vld [vmem:[#allocation2 + $0x34] sm:$0xf]
    %v1191 = vld [vmem:[#allocation2 + $0x38] sm:$0xf]
    %v1192 = vld [vmem:[#allocation2 + $0x3c] sm:$0xf]
    %v1193 = vld [vmem:[#allocation2 + $0x40] sm:$0xf]
    %v1194 = vld [vmem:[#allocation2 + $0x44] sm:$0xf]
    %v1195 = vld [vmem:[#allocation2 + $0x48] sm:$0xf]
    %v1196 = vld [vmem:[#allocation2 + $0x4c] sm:$0xf]
    %v1197 = vld [vmem:[#allocation2 + $0x50] sm:$0xf]
    %v1198 = vld [vmem:[#allocation2 + $0x54] sm:$0xf]
    %v1199 = vld [vmem:[#allocation2 + $0x58] sm:$0xf]
    %v1200 = vld [vmem:[#allocation2 + $0x5c] sm:$0xf]
    %v1201 = vpack.c.bf16 %v1184, %v1183
    %v1218 = vunpack.c.l.b16 %v1185
    %v1219 = vunpack.c.l.b16 %v1186
    %v1220 = vunpack.c.l.b16 %v1187
    %v1221 = vunpack.c.l.b16 %v1188
    %v1222 = vunpack.c.l.b16 %v1189
    %v1223 = vunpack.c.l.b16 %v1190
    %v1224 = vunpack.c.l.b16 %v1191
    %v1225 = vunpack.c.l.b16 %v1192
    %v1226 = vunpack.c.l.b16 %v1193
    %v1227 = vunpack.c.l.b16 %v1194
    %v1228 = vunpack.c.l.b16 %v1195
    %v1229 = vunpack.c.l.b16 %v1196
    %v1230 = vunpack.c.l.b16 %v1197
    %v1231 = vunpack.c.l.b16 %v1198
    %v1232 = vunpack.c.l.b16 %v1199
    %v1233 = vunpack.c.l.b16 %v1200
    %v1234 = vpack.c.b16 %v1219, %v1218
    %v1235 = vpack.c.b16 %v1221, %v1220
    %v1236 = vpack.c.b16 %v1223, %v1222
    %v1237 = vpack.c.b16 %v1225, %v1224
    %v1238 = vpack.c.b16 %v1227, %v1226
    %v1239 = vpack.c.b16 %v1229, %v1228
    %v1240 = vpack.c.b16 %v1231, %v1230
    %v1241 = vpack.c.b16 %v1233, %v1232
    %1250 = vmatprep.subr.bf16.mxu0 0
    %1251 = vmatpush1.bf16.msra.mxu0 %v1234
    %1252 = vmatprep.subr.bf16.mxu0 0
    %1253 = vmatpush1.bf16.msra.mxu0 %v1235
    %1254 = vmatprep.subr.bf16.mxu0 0
    %1255 = vmatpush1.bf16.msra.mxu0 %v1236
    %1256 = vmatprep.subr.bf16.mxu0 0
    %1257 = vmatpush1.bf16.msra.mxu0 %v1237
    %1258 = vmatprep.subr.bf16.mxu0 0
    %1259 = vmatpush1.bf16.msra.mxu0 %v1238
    %1260 = vmatprep.subr.bf16.mxu0 0
    %1261 = vmatpush1.bf16.msra.mxu0 %v1239
    %1262 = vmatprep.subr.bf16.mxu0 0
    %1263 = vmatpush1.bf16.msra.mxu0 %v1240
    %1264 = vmatprep.subr.bf16.mxu0 0
    %1265 = vmatpush1.bf16.msra.mxu0 %v1241
    %1266 = vmatprep.subr.bf16.mxu0 0
    %1267 = vmatpush1.bf16.msra.mxu0 0
    %1268 = vmatprep.subr.bf16.mxu0 0
    %1269 = vmatpush1.bf16.msra.mxu0 0
    %1270 = vmatprep.subr.bf16.mxu0 0
    %1271 = vmatpush1.bf16.msra.mxu0 0
    %1272 = vmatprep.subr.bf16.mxu0 0
    %1273 = vmatpush1.bf16.msra.mxu0 0
    %1274 = vmatprep.subr.bf16.mxu0 0
    %1275 = vmatpush1.bf16.msra.mxu0 0
    %1276 = vmatprep.subr.bf16.mxu0 0
    %1277 = vmatpush1.bf16.msra.mxu0 0
    %1278 = vmatprep.subr.bf16.mxu0 0
    %1279 = vmatpush1.bf16.msra.mxu0 0
    %1280 = vmatprep.subr.bf16.mxu0 0
    %1281 = vmatpush1.bf16.msra.mxu0 0
    %1282 = vmatprep.mubr.bf16.mxu0 0
    %1283 = vmatmul.mubr.bf16.gmra.mrb[0].mxu0 %v1201
    %v1284 = vpop.f32.mrb[0].mxu0
    %v1285 = vadd.f32 0.0, %v1284
    %v1286 = vpop.f32.mrb[0].mxu0
    %v1287 = vpop.f32.mrb[0].mxu0
    %v1288 = vadd.f32 0.0, %v1287
    %v1289 = vpop.f32.mrb[0].mxu0
    %1290 = vdwg.mxu0
    %v1291 = vadd.f32 %v1023, %v1285
    %v1292 = vadd.f32 %v1024, %v1288
    %v1293 = vld [vmem:[#allocation5 + $0x51] sm:$0x1]
    %v1294 = vlaneseq
    %v1295 = vshrl.u32 %v1294, 7
    %v1296 = vsub.s32 0, %v1295
    %v1297 = vrot.slane %v1293, %v1296
    %v1298 = vadd.f32 %v1291, %v1297
    %v1299 = vadd.f32 %v1292, %v1297
    %v1300 = vld [vmem:[#allocation5 + $0x4c] sm:$0x1]
    %v1301 = vld [vmem:[#allocation5 + $0x4d] sm:$0x1]
    %v1302 = vsel %vm205, %v1298, 0.0
    %1303 = vadd.xlane.f32.xlu0 %v1302
    %v1304 = vpop.xlane.xlu0 %1303
    %v1305 = vsel %vm205, %v1299, 0.0
    %1306 = vadd.xlane.f32.xlu0 %v1305
    %v1307 = vpop.xlane.xlu0 %1306
    %v1308 = vmul.f32 %v1304, %v212
    %v1309 = vmul.f32 %v1307, %v212
    %v1310 = vsub.f32 %v1298, %v1308
    %v1311 = vsub.f32 %v1299, %v1309
    %v1312 = vmul.f32 %v1310, %v1310
    %v1313 = vmul.f32 %v1311, %v1311
    %v1314 = vsel %vm205, %v1312, 0.0
    %1315 = vadd.xlane.f32.xlu0 %v1314
    %v1316 = vpop.xlane.xlu0 %1315
    %v1317 = vsel %vm205, %v1313, 0.0
    %1318 = vadd.xlane.f32.xlu0 %v1317
    %v1319 = vpop.xlane.xlu0 %1318
    %v1320 = vmul.f32 %v1316, %v212
    %v1321 = vmul.f32 %v1319, %v212
    %v1322 = vadd.f32 %v1320, 1e-05
    %v1323 = vadd.f32 %v1321, 1e-05
    %v1324 = vrsqrt.pop %v1322
    %v1325 = vrsqrt.pop %v1323
    %v1326 = vmul.f32 %v1310, %v1324
    %v1327 = vmul.f32 %v1311, %v1325
    %v1328 = vlaneseq
    %v1329 = vshrl.u32 %v1328, 7
    %v1330 = vsub.s32 0, %v1329
    %v1331 = vrot.slane %v1300, %v1330
    %v1332 = vmul.f32 %v1326, %v1331
    %v1333 = vmul.f32 %v1327, %v1331
    %v1334 = vlaneseq
    %v1335 = vshrl.u32 %v1334, 7
    %v1336 = vsub.s32 0, %v1335
    %v1337 = vrot.slane %v1301, %v1336
    %v1338 = vadd.f32 %v1332, %v1337
    %v1339 = vadd.f32 %v1333, %v1337
    %v1340 = vld [vmem:[#allocation2 + $0x60] sm:$0xf]
    %v1341 = vld [vmem:[#allocation2 + $0x64] sm:$0xf]
    %v1342 = vld [vmem:[#allocation2 + $0x68] sm:$0xf]
    %v1343 = vld [vmem:[#allocation2 + $0x6c] sm:$0xf]
    %v1344 = vpack.c.bf16 %v1339, %v1338
    %v1349 = vunpack.c.l.b16 %v1340
    %v1350 = vunpack.c.l.b16 %v1341
    %v1351 = vunpack.c.l.b16 %v1342
    %v1352 = vunpack.c.l.b16 %v1343
    %v1353 = vpack.c.b16 %v1350, %v1349
    %v1354 = vpack.c.b16 %v1352, %v1351
    %v1358 = vsel %vm205, %v1344, 0
    %1360 = vmatprep.subr.bf16.mxu0 0
    %1361 = vmatpush1.bf16.msra.mxu0 %v1353
    %1362 = vmatprep.subr.bf16.mxu0 0
    %1363 = vmatpush1.bf16.msra.mxu0 %v1354
    %1364 = vmatprep.subr.bf16.mxu0 0
    %1365 = vmatpush1.bf16.msra.mxu0 0
    %1366 = vmatprep.subr.bf16.mxu0 0
    %1367 = vmatpush1.bf16.msra.mxu0 0
    %1368 = vmatprep.subr.bf16.mxu0 0
    %1369 = vmatpush1.bf16.msra.mxu0 0
    %1370 = vmatprep.subr.bf16.mxu0 0
    %1371 = vmatpush1.bf16.msra.mxu0 0
    %1372 = vmatprep.subr.bf16.mxu0 0
    %1373 = vmatpush1.bf16.msra.mxu0 0
    %1374 = vmatprep.subr.bf16.mxu0 0
    %1375 = vmatpush1.bf16.msra.mxu0 0
    %1376 = vmatprep.subr.bf16.mxu0 0
    %1377 = vmatpush1.bf16.msra.mxu0 0
    %1378 = vmatprep.subr.bf16.mxu0 0
    %1379 = vmatpush1.bf16.msra.mxu0 0
    %1380 = vmatprep.subr.bf16.mxu0 0
    %1381 = vmatpush1.bf16.msra.mxu0 0
    %1382 = vmatprep.subr.bf16.mxu0 0
    %1383 = vmatpush1.bf16.msra.mxu0 0
    %1384 = vmatprep.subr.bf16.mxu0 0
    %1385 = vmatpush1.bf16.msra.mxu0 0
    %1386 = vmatprep.subr.bf16.mxu0 0
    %1387 = vmatpush1.bf16.msra.mxu0 0
    %1388 = vmatprep.subr.bf16.mxu0 0
    %1389 = vmatpush1.bf16.msra.mxu0 0
    %1390 = vmatprep.subr.bf16.mxu0 0
    %1391 = vmatpush1.bf16.msra.mxu0 0
    %1392 = vmatprep.mubr.bf16.mxu0 0
    %1393 = vmatmul.mubr.bf16.gmra.mrb[0].mxu0 %v1358
    %v1394 = vpop.f32.mrb[0].mxu0
    %v1395 = vadd.f32 0.0, %v1394
    %v1396 = vpop.f32.mrb[0].mxu0
    %v1397 = vpop.f32.mrb[0].mxu0
    %v1398 = vadd.f32 0.0, %v1397
    %v1399 = vpop.f32.mrb[0].mxu0
    %1400 = vdwg.mxu0
    %vm1401 = vcmask 523264
    %1402 = vst.msk [vmem:[#allocation7] sm:$0xff] %vm1401, %v1395
    %1403 = vst.msk [vmem:[#allocation7 + $0x8] sm:$0xff] %vm1401, %v1398
    // Predicated region
    $region22: #{spatialnet_forward.1} parent=1 // pred_check
      _
    $region23: #{spatialnet_forward.1} parent=1 // pred_check_branch
      %1405 = sbr.rel (0) target = $region25
    $region24: #{spatialnet_forward.1} parent=1 // pred_region
      %s1407 = ssub.s32 256, 256
      %1408 = vsyncadd [#allocation4], %s1407
      %s1409 = sshll.u32 [#allocation7], 4
      %s1410 = int_to_ptr.vmem [resolvable:$true] %s1409
      %1415 = dma.vmem_to_hbm [thread:$0]  %s1410, 256, %s3, [#allocation4], 128, 128, 8
    $region25: #{spatialnet_forward.1} parent=1 // pred_fallthru
      _
    // Predicated region
    $region26: #{spatialnet_forward.1} parent=1 // pred_check
      _
    $region27: #{spatialnet_forward.1} parent=1 // pred_check_branch
      %1417 = sbr.rel (0) target = $region29
    $region28: #{spatialnet_forward.1} parent=1 // pred_region
      %1418 = dma.done [#allocation4], 256
    $region29: #{spatialnet_forward.1} parent=1 // pred_fallthru
      _
    %1419 = vsyncpa [#allocation3], 1
    %1420 = vsyncpa [#allocation6], 1
    %1421 = vsyncpa [#allocation4], 1

</llo_original>
